<compile_context>
chip_gen: v6e
topology: v6e:2x2x1
jax: 0.10.0
libtpu: 0.0.40
codegen_flags: <defaults>
</compile_context>

<pallas_src>
import functools
import math

import jax
import jax.numpy as jnp
from jax.experimental import pallas as pl
from jax.experimental.pallas import tpu as pltpu


def _positional_encoding(length: int, d_model: int) -> jax.Array:
    """Sinusoidal table used by the module's `self.pe` (PositionalEncoding)."""
    position = jnp.arange(length, dtype=jnp.float32)[:, None]
    div_term = jnp.exp(
        jnp.arange(0, d_model, 2, dtype=jnp.float32) * (-math.log(10000.0) / d_model)
    )
    pe = jnp.zeros((length, d_model), jnp.float32)
    pe = pe.at[:, 0::2].set(jnp.sin(position * div_term))
    pe = pe.at[:, 1::2].set(jnp.cos(position * div_term))
    return pe


def _rel_mha_kernel(
    lens_ref,     # SMEM (B,) int32 (scalar-prefetched effective lengths)
    x_ref,        # (T, E)      word embeddings for batch b
    wqkv_ref,     # (E, 3*H*D)  packed q|k|v projection weights (head-major columns)
    r_ref,        # (K, H*D)    precomputed positional projection (bf16)
    wout_ref,     # (H*D, E)    output projection
    rwb_ref,      # (1, H*D)    r_w_bias (heads packed)
    rrb_ref,      # (1, H*D)    r_r_bias (heads packed)
    out_ref,      # (T, E)      output block for batch b
    shift_ref,    # VMEM (T+1, WPAD) scratch for the relative shift
    *, scale: float, n_head: int, d_head: int,
):
    T, E = x_ref.shape
    K, HD = r_ref.shape
    H, D = n_head, d_head
    b = pl.program_id(0)

    # ---- fused projections: one wide MXU matmul for all heads, then full-width bias adds.
    qkv = jax.lax.dot_general(
        x_ref[...], wqkv_ref[...], (((1,), (0,)), ((), ())),
        preferred_element_type=jnp.float32)                      # (T, 3*H*D)
    q = qkv[:, 0:HD]
    qrw_bf = (q + rwb_ref[...]).astype(jnp.bfloat16)             # (T, HD)
    qrr_bf = (q + rrb_ref[...]).astype(jnp.bfloat16)             # (T, HD)
    k_bf = qkv[:, HD:2 * HD].astype(jnp.bfloat16)                # (K, HD)  (K == T, no mems)
    v_bf = qkv[:, 2 * HD:3 * HD].astype(jnp.bfloat16)            # (K, HD)
    r_bf = r_ref[...]                                            # (K, HD), already bf16

    # ---- head-invariant key-length mask, as an additive bias row (hoisted out of head loop)
    kcol = jax.lax.broadcasted_iota(jnp.int32, (1, K), 1)
    mask_bias = jnp.where(kcol >= lens_ref[b], jnp.float32(-1e30), jnp.float32(0.0))

    # ---- relative-shift scratch: only the single zero column (col K) needs initializing;
    #      cols [0,K) and [K+1,2K+1) are overwritten per head, and pad garbage beyond 2K
    #      never reaches the final K-wide window (the shear uses selects only).
    shift_ref[pl.ds(0, T + 1), pl.ds(K, 1)] = jnp.zeros((T + 1, 1), jnp.float32)

    ctx_parts = []
    for h in range(H):                       # statically unrolled; all slices are static
        sl = slice(h * D, (h + 1) * D)

        # 'ibnd,jbnd->ijbn' and 'ibnd,jnd->ijbn' slices for this (batch, head):
        ac = jax.lax.dot_general(
            qrw_bf[:, sl], k_bf[:, sl], (((1,), (1,)), ((), ())),
            preferred_element_type=jnp.float32)                  # (T, K)
        bd = jax.lax.dot_general(
            qrr_bf[:, sl], r_bf[:, sl], (((1,), (1,)), ((), ())),
            preferred_element_type=jnp.float32)                  # (T, K)

        # ---- Transformer-XL relative shift (exact match of torch _rel_shift) ----
        # Lay out e[i, :] = [bd[i, 0:K], 0, bd[i+1, 0:K], pad] row-aligned in scratch,
        # then shifted[i, j] = e[i, j + (T - 1 - i)].
        shift_ref[pl.ds(1, T), pl.ds(0, K)] = bd        # row 1+i, cols [0, K)      <- bd[i]
        shift_ref[pl.ds(0, T), pl.ds(K + 1, K)] = bd    # row i,   cols [K+1, 2K+1) <- bd[i]
        e = shift_ref[pl.ds(1, T), :]                   # row i: bd[i] | 0 | bd[i+1] | pad

        # Per-row left shift by (T - 1 - i), applied as a log2(T)-step shear.
        res = e
        bit = 1
        while bit <= T - 1:
            width = res.shape[1] - bit
            rows = jax.lax.broadcasted_iota(jnp.int32, (T, width), 0)
            res = jnp.where(((T - 1 - rows) & bit) != 0, res[:, bit:], res[:, :width])
            bit <<= 1
        bd_shift = res[:, :K]                           # (T, K)

        score = (ac + bd_shift) * scale + mask_bias     # (T, K)

        # softmax over keys; EUP approx reciprocal instead of a vector divide
        m = jnp.max(score, axis=-1, keepdims=True)
        p = jnp.exp(score - m)
        prob = p * pl.reciprocal(jnp.sum(p, axis=-1, keepdims=True), approx=True)

        ctx_parts.append(
            jax.lax.dot_general(
                prob.astype(jnp.bfloat16), v_bf[:, sl], (((1,), (0,)), ((), ())),
                preferred_element_type=jnp.float32))             # (T, D)

    # ---- single wide output projection: contraction depth H*D instead of D
    ctx = jnp.concatenate(ctx_parts, axis=1)                     # (T, H*D)
    out_ref[...] = jax.lax.dot_general(
        ctx, wout_ref[...], (((1,), (0,)), ((), ())),
        preferred_element_type=jnp.float32)                      # (T, E)


def rel_position_mha(word_embedding, lens, params, *, n_head, d_head, mems=None):
    """JAX/Pallas equivalent of RelPositionMultiHeadAttention.forward (mems=None).

    word_embedding: (B, T, E) float32
    lens:           (B,) int
    params: w_qkv (3*H*D, E), w_pos (H*D, E), w_out (E, H*D), r_w_bias (H, D), r_r_bias (H, D)
    """
    if mems is not None:
        # TODO(synk): memory-context path (K > T) not wired up in this port.
        raise NotImplementedError("mems is not supported in this Pallas port")

    B, T, E = word_embedding.shape
    H, D = n_head, d_head
    HD = H * D
    K = T
    hp = jax.lax.Precision.HIGHEST

    # Positional projection is input/batch independent -> compute once at trace time.
    pos_enc = _positional_encoding(K, E)                                 # (K, E)
    r_all = jnp.einsum("ke,fe->kf", pos_enc, params["w_pos"],
                       precision=hp).astype(jnp.bfloat16)                # (K, HD) bf16

    # torch module disables the mask when all lengths are equal; emulate that without a
    # host sync so the wrapper stays jit-safe.
    lens = jnp.asarray(lens, dtype=jnp.int32)
    lens_eff = jnp.where(jnp.all(lens == lens[0]), jnp.full_like(lens, K), lens)

    # Packed (head-fused) weight layouts.
    w_qkv_packed = params["w_qkv"].T                                     # (E, 3*HD)
    w_out_packed = params["w_out"].T                                     # (HD, E)
    rwb = params["r_w_bias"].reshape(1, HD)
    rrb = params["r_r_bias"].reshape(1, HD)

    # Scratch width for the relative-shift shear: must hold [bd | 0 | bd_next] (2K+1) and
    # survive the cumulative truncation of the log-step shear (K + sum of shear bits).
    bits_total, bit = 0, 1
    while bit <= T - 1:
        bits_total += bit
        bit <<= 1
    wpad = max(2 * K + 1, K + bits_total)
    wpad = ((wpad + 127) // 128) * 128          # lane-aligned scratch width

    kernel = functools.partial(
        _rel_mha_kernel, scale=1.0 / math.sqrt(D), n_head=H, d_head=D)

    grid_spec = pltpu.PrefetchScalarGridSpec(
        num_scalar_prefetch=1,
        grid=(B,),
        in_specs=[
            pl.BlockSpec((None, T, E), lambda b, _: (b, 0, 0)),   # x (per batch)
            pl.BlockSpec((E, 3 * HD),  lambda b, _: (0, 0)),      # W_qkv packed
            pl.BlockSpec((K, HD),      lambda b, _: (0, 0)),      # precomputed r (bf16)
            pl.BlockSpec((HD, E),      lambda b, _: (0, 0)),      # W_out
            pl.BlockSpec((1, HD),      lambda b, _: (0, 0)),      # r_w_bias
            pl.BlockSpec((1, HD),      lambda b, _: (0, 0)),      # r_r_bias
        ],
        out_specs=pl.BlockSpec((None, T, E), lambda b, _: (b, 0, 0)),
        scratch_shapes=[pltpu.VMEM((T + 1, wpad), jnp.float32)],
    )

    flops = 2 * B * (T * E * 3 * HD          # fused qkv projection
                     + 3 * H * T * K * D     # ac + bd + p@v
                     + T * HD * E)           # output projection
    cost = pl.CostEstimate(
        flops=flops,
        transcendentals=B * H * T * K,
        bytes_accessed=(2 * B * T * E * 4 + E * 3 * HD * 4 + K * HD * 2
                        + HD * E * 4 + 2 * HD * 4 + B * 4),
    )

    return pl.pallas_call(
        kernel,
        out_shape=jax.ShapeDtypeStruct((B, T, E), jnp.float32),
        grid_spec=grid_spec,
        compiler_params=pltpu.CompilerParams(
            dimension_semantics=("parallel",),
            vmem_limit_bytes=32 * 1024 * 1024,
        ),
        cost_estimate=cost,
    )(lens_eff, word_embedding, w_qkv_packed, r_all, w_out_packed, rwb, rrb)


# ----------------------------- pure-JAX reference -----------------------------

def _rel_shift_ref(x):
    """Mirror of RelPositionMultiHeadAttention._rel_shift for x of shape (T, K, B, H)."""
    T, K = x.shape[0], x.shape[1]
    zero_pad = jnp.zeros((T, 1) + x.shape[2:], x.dtype)
    x_padded = jnp.concatenate([zero_pad, x], axis=1)
    x_padded = x_padded.reshape((K + 1, T) + x.shape[2:])
    return x_padded[1:].reshape(x.shape)


def rel_position_mha_reference(word_embedding, lens, params, *, n_head, d_head):
    B, T, E = word_embedding.shape
    H, D = n_head, d_head
    hp = jax.lax.Precision.HIGHEST
    x = jnp.transpose(word_embedding, (1, 0, 2))            # (T, B, E)
    len_k = T
    lens = jnp.asarray(lens, jnp.int32)
    lens_eff = jnp.where(jnp.all(lens == lens[0]), jnp.full_like(lens, len_k), lens)
    attn_mask = jnp.arange(len_k)[:, None] >= lens_eff[None, :]
    pos_enc = _positional_encoding(len_k, E)                 # (K, E)

    w_heads = jnp.einsum("tbe,fe->tbf", x, params["w_qkv"], precision=hp)
    r_head_k = jnp.einsum("ke,fe->kf", pos_enc, params["w_pos"], precision=hp)
    w_head_q, w_head_k, w_head_v = jnp.split(w_heads, 3, axis=-1)
    w_head_q = w_head_q.reshape(T, B, H, D)
    w_head_k = w_head_k.reshape(len_k, B, H, D)
    w_head_v = w_head_v.reshape(len_k, B, H, D)
    r_head_k = r_head_k.reshape(len_k, H, D)

    rw_head_q = w_head_q + params["r_w_bias"]
    rr_head_q = w_head_q + params["r_r_bias"]
    ac = jnp.einsum("ibnd,jbnd->ijbn", rw_head_q, w_head_k, precision=hp)
    bd = jnp.einsum("ibnd,jnd->ijbn", rr_head_q, r_head_k, precision=hp)
    bd = _rel_shift_ref(bd)

    attn_score = (ac + bd) * (1.0 / math.sqrt(D))
    attn_score = jnp.where(attn_mask[None, :, :, None], -1e30, attn_score)
    attn_prob = jax.nn.softmax(attn_score, axis=1)
    attn_vec = jnp.einsum("ijbn,jbnd->ibnd", attn_prob, w_head_v, precision=hp)
    attn_vec = attn_vec.reshape(T, B, H * D)
    attn_out = jnp.einsum("ibf,ef->ibe", attn_vec, params["w_out"], precision=hp)
    return jnp.transpose(attn_out, (1, 0, 2))                # (B, T, E)


if __name__ == "__main__":
    B, T, E, H, D = 2, 16, 128, 4, 32    # E and H*D multiples of 128 -> lane-dense

    key = jax.random.PRNGKey(0)
    k1, k2, k3, k4, k5, k6 = jax.random.split(key, 6)
    params = {
        "w_qkv":    jax.random.normal(k1, (3 * H * D, E), jnp.float32) / math.sqrt(E),
        "w_pos":    jax.random.normal(k2, (H * D, E), jnp.float32) / math.sqrt(E),
        "w_out":    jax.random.normal(k3, (E, H * D), jnp.float32) / math.sqrt(H * D),
        "r_w_bias": jax.random.normal(k4, (H, D), jnp.float32) * 0.1,
        "r_r_bias": jax.random.normal(k5, (H, D), jnp.float32) * 0.1,
    }
    x = jax.random.normal(k6, (B, T, E), jnp.float32)
    lens = jnp.array([T, T - 5], dtype=jnp.int32)   # unequal -> attention-mask path

    fwd = jax.jit(functools.partial(rel_position_mha, n_head=H, d_head=D))
    out = jax.block_until_ready(fwd(x, lens, params))

    ref = jax.block_until_ready(
        rel_position_mha_reference(x, lens, params, n_head=H, d_head=D))

    assert out.shape == (B, T, E) and out.dtype == jnp.float32
    # The kernel deliberately feeds bf16 operands to the score / P@V matmuls (f32
    # accumulation) and uses an approx reciprocal, so the tolerance reflects bf16 input
    # rounding (~1e-2).  Real shift/mask/accumulation bugs produce O(0.1+) errors.
    max_err = float(jnp.max(jnp.abs(out - ref)))
    assert jnp.allclose(out, ref, atol=2e-2, rtol=2e-2), (
        f"mismatch vs reference: max abs err {max_err}")

    print("KERNEL_OK")
</pallas_src>

<mosaic_0001>
module attributes {stable_mosaic.version = 11 : i64} {
  func.func @_rel_mha_kernel(%arg0: i32, %arg1: memref<2xi32, #tpu.memory_space<smem>>, %arg2: memref<1x16x128xf32, #tpu.memory_space<vmem>>, %arg3: memref<128x384xf32, #tpu.memory_space<vmem>>, %arg4: memref<16x128xbf16, #tpu.memory_space<vmem>>, %arg5: memref<128x128xf32, #tpu.memory_space<vmem>>, %arg6: memref<1x128xf32, #tpu.memory_space<vmem>>, %arg7: memref<1x128xf32, #tpu.memory_space<vmem>>, %arg8: memref<1x16x128xf32, #tpu.memory_space<vmem>>, %arg9: memref<17x128xf32, #tpu.memory_space<vmem>>) attributes {dimension_semantics = [#tpu.dimension_semantics<parallel>], iteration_bounds = array<i64: 2>, scalar_prefetch = 1 : i64, scratch_operands = 1 : i64, tpu.core_type = #tpu.core_type<tc>, window_params = [{transform_indices = @transform_0, window_bounds = array<i64: 1, 16, 128>}, {pipeline_mode = #tpu.pipeline_mode<synchronous>, transform_indices = @transform_1, window_bounds = array<i64: 128, 384>}, {pipeline_mode = #tpu.pipeline_mode<synchronous>, transform_indices = @transform_2, window_bounds = array<i64: 16, 128>}, {pipeline_mode = #tpu.pipeline_mode<synchronous>, transform_indices = @transform_3, window_bounds = array<i64: 128, 128>}, {pipeline_mode = #tpu.pipeline_mode<synchronous>, transform_indices = @transform_4, window_bounds = array<i64: 1, 128>}, {pipeline_mode = #tpu.pipeline_mode<synchronous>, transform_indices = @transform_5, window_bounds = array<i64: 1, 128>}, {transform_indices = @transform_6, window_bounds = array<i64: 1, 16, 128>}]} {
    %c0 = arith.constant 0 : index
    %c0_0 = arith.constant 0 : index
    %c0_1 = arith.constant 0 : index
    %0 = vector.load %arg2[%c0, %c0_0, %c0_1] : memref<1x16x128xf32, #tpu.memory_space<vmem>>, vector<1x16x128xf32>
    %1 = vector.shape_cast %0 : vector<1x16x128xf32> to vector<16x128xf32>
    %c0_2 = arith.constant 0 : index
    %c0_3 = arith.constant 0 : index
    %2 = vector.load %arg3[%c0_2, %c0_3] : memref<128x384xf32, #tpu.memory_space<vmem>>, vector<128x384xf32>
    %cst = arith.constant dense<0.000000e+00> : vector<16x384xf32>
    %3 = tpu.matmul %1, %2, %cst {dimension_numbers = #tpu.dot_dimension_numbers<[1], [0], [0], [1], [0, 0, 1, 1], [], []>} : vector<16x128xf32>, vector<128x384xf32>, vector<16x384xf32> -> vector<16x384xf32>
    %4 = vector.extract_strided_slice %3 {offsets = [0, 0], sizes = [16, 128], strides = [1, 1]} : vector<16x384xf32> to vector<16x128xf32>
    %c0_4 = arith.constant 0 : index
    %c0_5 = arith.constant 0 : index
    %5 = vector.load %arg6[%c0_4, %c0_5] : memref<1x128xf32, #tpu.memory_space<vmem>>, vector<1x128xf32>
    %6 = vector.broadcast %5 : vector<1x128xf32> to vector<16x128xf32>
    %7 = arith.addf %4, %6 : vector<16x128xf32>
    %8 = arith.truncf %7 : vector<16x128xf32> to vector<16x128xbf16>
    %c0_6 = arith.constant 0 : index
    %c0_7 = arith.constant 0 : index
    %9 = vector.load %arg7[%c0_6, %c0_7] : memref<1x128xf32, #tpu.memory_space<vmem>>, vector<1x128xf32>
    %10 = vector.broadcast %9 : vector<1x128xf32> to vector<16x128xf32>
    %11 = arith.addf %4, %10 : vector<16x128xf32>
    %12 = arith.truncf %11 : vector<16x128xf32> to vector<16x128xbf16>
    %13 = vector.extract_strided_slice %3 {offsets = [0, 128], sizes = [16, 128], strides = [1, 1]} : vector<16x384xf32> to vector<16x128xf32>
    %14 = arith.truncf %13 : vector<16x128xf32> to vector<16x128xbf16>
    %15 = vector.extract_strided_slice %3 {offsets = [0, 256], sizes = [16, 128], strides = [1, 1]} : vector<16x384xf32> to vector<16x128xf32>
    %16 = arith.truncf %15 : vector<16x128xf32> to vector<16x128xbf16>
    %c0_8 = arith.constant 0 : index
    %c0_9 = arith.constant 0 : index
    %17 = vector.load %arg4[%c0_8, %c0_9] : memref<16x128xbf16, #tpu.memory_space<vmem>>, vector<16x128xbf16>
    %18 = tpu.iota {dimensions = array<i32: 1>} : vector<1x16xi32>
    %19 = arith.index_cast %arg0 : i32 to index
    %20 = memref.load %arg1[%19] : memref<2xi32, #tpu.memory_space<smem>>
    %21 = vector.broadcast %20 : i32 to vector<1x16xi32>
    %22 = arith.cmpi sge, %18, %21 : vector<1x16xi32>
    %cst_10 = arith.constant -1.000000e+30 : f32
    %cst_11 = arith.constant 0.000000e+00 : f32
    %23 = vector.broadcast %cst_10 : f32 to vector<1x16xf32>
    %24 = vector.broadcast %cst_11 : f32 to vector<1x16xf32>
    %25 = arith.select %22, %23, %24 : vector<1x16xi1>, vector<1x16xf32>
    %cst_12 = arith.constant 0.000000e+00 : f32
    %26 = vector.broadcast %cst_12 : f32 to vector<17x1xf32>
    %c0_13 = arith.constant 0 : index
    %c16 = arith.constant 16 : index
    %27 = vector.load %arg9[%c0_13, %c16] : memref<17x128xf32, #tpu.memory_space<vmem>>, vector<17x1xf32>
    tpu.vector_store %arg9[%c0_13, %c16], %26 {strides = array<i32>} : memref<17x128xf32, #tpu.memory_space<vmem>>, vector<17x1xf32>,
    %28 = vector.extract_strided_slice %8 {offsets = [0, 0], sizes = [16, 32], strides = [1, 1]} : vector<16x128xbf16> to vector<16x32xbf16>
    %29 = vector.extract_strided_slice %14 {offsets = [0, 0], sizes = [16, 32], strides = [1, 1]} : vector<16x128xbf16> to vector<16x32xbf16>
    %cst_14 = arith.constant dense<0.000000e+00> : vector<16x16xf32>
    %30 = tpu.matmul %28, %29, %cst_14 {dimension_numbers = #tpu.dot_dimension_numbers<[1], [1], [0], [0], [0, 0, 1, 0], [], []>} : vector<16x32xbf16>, vector<16x32xbf16>, vector<16x16xf32> -> vector<16x16xf32>
    %31 = vector.extract_strided_slice %12 {offsets = [0, 0], sizes = [16, 32], strides = [1, 1]} : vector<16x128xbf16> to vector<16x32xbf16>
    %32 = vector.extract_strided_slice %17 {offsets = [0, 0], sizes = [16, 32], strides = [1, 1]} : vector<16x128xbf16> to vector<16x32xbf16>
    %cst_15 = arith.constant dense<0.000000e+00> : vector<16x16xf32>
    %33 = tpu.matmul %31, %32, %cst_15 {dimension_numbers = #tpu.dot_dimension_numbers<[1], [1], [0], [0], [0, 0, 1, 0], [], []>} : vector<16x32xbf16>, vector<16x32xbf16>, vector<16x16xf32> -> vector<16x16xf32>
    %c1 = arith.constant 1 : index
    %c0_16 = arith.constant 0 : index
    %34 = vector.load %arg9[%c1, %c0_16] : memref<17x128xf32, #tpu.memory_space<vmem>>, vector<16x16xf32>
    tpu.vector_store %arg9[%c1, %c0_16], %33 {strides = array<i32>} : memref<17x128xf32, #tpu.memory_space<vmem>>, vector<16x16xf32>,
    %c0_17 = arith.constant 0 : index
    %c17 = arith.constant 17 : index
    %35 = vector.load %arg9[%c0_17, %c17] : memref<17x128xf32, #tpu.memory_space<vmem>>, vector<16x16xf32>
    tpu.vector_store %arg9[%c0_17, %c17], %33 {strides = array<i32>} : memref<17x128xf32, #tpu.memory_space<vmem>>, vector<16x16xf32>,
    %c1_18 = arith.constant 1 : index
    %c0_19 = arith.constant 0 : index
    %36 = vector.load %arg9[%c1_18, %c0_19] : memref<17x128xf32, #tpu.memory_space<vmem>>, vector<16x128xf32>
    %37 = tpu.iota {dimensions = array<i32: 0>} : vector<16x127xi32>
    %c15_i32 = arith.constant 15 : i32
    %38 = vector.broadcast %c15_i32 : i32 to vector<16x127xi32>
    %39 = arith.subi %38, %37 : vector<16x127xi32>
    %c1_i32 = arith.constant 1 : i32
    %40 = vector.broadcast %c1_i32 : i32 to vector<16x127xi32>
    %41 = arith.andi %39, %40 : vector<16x127xi32>
    %c0_i32 = arith.constant 0 : i32
    %42 = vector.broadcast %c0_i32 : i32 to vector<16x127xi32>
    %43 = arith.cmpi ne, %41, %42 : vector<16x127xi32>
    %44 = vector.extract_strided_slice %36 {offsets = [0, 1], sizes = [16, 127], strides = [1, 1]} : vector<16x128xf32> to vector<16x127xf32>
    %45 = vector.extract_strided_slice %36 {offsets = [0, 0], sizes = [16, 127], strides = [1, 1]} : vector<16x128xf32> to vector<16x127xf32>
    %46 = arith.select %43, %44, %45 : vector<16x127xi1>, vector<16x127xf32>
    %47 = tpu.iota {dimensions = array<i32: 0>} : vector<16x125xi32>
    %c15_i32_20 = arith.constant 15 : i32
    %48 = vector.broadcast %c15_i32_20 : i32 to vector<16x125xi32>
    %49 = arith.subi %48, %47 : vector<16x125xi32>
    %c2_i32 = arith.constant 2 : i32
    %50 = vector.broadcast %c2_i32 : i32 to vector<16x125xi32>
    %51 = arith.andi %49, %50 : vector<16x125xi32>
    %c0_i32_21 = arith.constant 0 : i32
    %52 = vector.broadcast %c0_i32_21 : i32 to vector<16x125xi32>
    %53 = arith.cmpi ne, %51, %52 : vector<16x125xi32>
    %54 = vector.extract_strided_slice %46 {offsets = [0, 2], sizes = [16, 125], strides = [1, 1]} : vector<16x127xf32> to vector<16x125xf32>
    %55 = vector.extract_strided_slice %46 {offsets = [0, 0], sizes = [16, 125], strides = [1, 1]} : vector<16x127xf32> to vector<16x125xf32>
    %56 = arith.select %53, %54, %55 : vector<16x125xi1>, vector<16x125xf32>
    %57 = tpu.iota {dimensions = array<i32: 0>} : vector<16x121xi32>
    %c15_i32_22 = arith.constant 15 : i32
    %58 = vector.broadcast %c15_i32_22 : i32 to vector<16x121xi32>
    %59 = arith.subi %58, %57 : vector<16x121xi32>
    %c4_i32 = arith.constant 4 : i32
    %60 = vector.broadcast %c4_i32 : i32 to vector<16x121xi32>
    %61 = arith.andi %59, %60 : vector<16x121xi32>
    %c0_i32_23 = arith.constant 0 : i32
    %62 = vector.broadcast %c0_i32_23 : i32 to vector<16x121xi32>
    %63 = arith.cmpi ne, %61, %62 : vector<16x121xi32>
    %64 = vector.extract_strided_slice %56 {offsets = [0, 4], sizes = [16, 121], strides = [1, 1]} : vector<16x125xf32> to vector<16x121xf32>
    %65 = vector.extract_strided_slice %56 {offsets = [0, 0], sizes = [16, 121], strides = [1, 1]} : vector<16x125xf32> to vector<16x121xf32>
    %66 = arith.select %63, %64, %65 : vector<16x121xi1>, vector<16x121xf32>
    %67 = tpu.iota {dimensions = array<i32: 0>} : vector<16x113xi32>
    %c15_i32_24 = arith.constant 15 : i32
    %68 = vector.broadcast %c15_i32_24 : i32 to vector<16x113xi32>
    %69 = arith.subi %68, %67 : vector<16x113xi32>
    %c8_i32 = arith.constant 8 : i32
    %70 = vector.broadcast %c8_i32 : i32 to vector<16x113xi32>
    %71 = arith.andi %69, %70 : vector<16x113xi32>
    %c0_i32_25 = arith.constant 0 : i32
    %72 = vector.broadcast %c0_i32_25 : i32 to vector<16x113xi32>
    %73 = arith.cmpi ne, %71, %72 : vector<16x113xi32>
    %74 = vector.extract_strided_slice %66 {offsets = [0, 8], sizes = [16, 113], strides = [1, 1]} : vector<16x121xf32> to vector<16x113xf32>
    %75 = vector.extract_strided_slice %66 {offsets = [0, 0], sizes = [16, 113], strides = [1, 1]} : vector<16x121xf32> to vector<16x113xf32>
    %76 = arith.select %73, %74, %75 : vector<16x113xi1>, vector<16x113xf32>
    %77 = vector.extract_strided_slice %76 {offsets = [0, 0], sizes = [16, 16], strides = [1, 1]} : vector<16x113xf32> to vector<16x16xf32>
    %78 = arith.addf %30, %77 : vector<16x16xf32>
    %cst_26 = arith.constant 0.176776692 : f32
    %79 = vector.broadcast %cst_26 : f32 to vector<16x16xf32>
    %80 = arith.mulf %78, %79 : vector<16x16xf32>
    %81 = vector.broadcast %25 : vector<1x16xf32> to vector<16x16xf32>
    %82 = arith.addf %80, %81 : vector<16x16xf32>
    %cst_27 = arith.constant dense<0xFF800000> : vector<16xf32>
    %83 = vector.multi_reduction <maximumf>, %82, %cst_27 [1] : vector<16x16xf32> to vector<16xf32>
    %84 = vector.shape_cast %83 : vector<16xf32> to vector<16x1xf32>
    %85 = vector.broadcast %84 : vector<16x1xf32> to vector<16x16xf32>
    %86 = arith.subf %82, %85 : vector<16x16xf32>
    %87 = math.exp %86 : vector<16x16xf32>
    %cst_28 = arith.constant dense<0.000000e+00> : vector<16xf32>
    %88 = vector.multi_reduction <add>, %87, %cst_28 [1] : vector<16x16xf32> to vector<16xf32>
    %89 = vector.shape_cast %88 : vector<16xf32> to vector<16x1xf32>
    %90 = tpu.reciprocal %89 {approx = true} : vector<16x1xf32> -> vector<16x1xf32>
    %91 = vector.broadcast %90 : vector<16x1xf32> to vector<16x16xf32>
    %92 = arith.mulf %87, %91 : vector<16x16xf32>
    %93 = arith.truncf %92 : vector<16x16xf32> to vector<16x16xbf16>
    %94 = vector.extract_strided_slice %16 {offsets = [0, 0], sizes = [16, 32], strides = [1, 1]} : vector<16x128xbf16> to vector<16x32xbf16>
    %cst_29 = arith.constant dense<0.000000e+00> : vector<16x32xf32>
    %95 = tpu.matmul %93, %94, %cst_29 {dimension_numbers = #tpu.dot_dimension_numbers<[1], [0], [0], [1], [0, 0, 1, 1], [], []>} : vector<16x16xbf16>, vector<16x32xbf16>, vector<16x32xf32> -> vector<16x32xf32>
    %96 = vector.extract_strided_slice %8 {offsets = [0, 32], sizes = [16, 32], strides = [1, 1]} : vector<16x128xbf16> to vector<16x32xbf16>
    %97 = vector.extract_strided_slice %14 {offsets = [0, 32], sizes = [16, 32], strides = [1, 1]} : vector<16x128xbf16> to vector<16x32xbf16>
    %cst_30 = arith.constant dense<0.000000e+00> : vector<16x16xf32>
    %98 = tpu.matmul %96, %97, %cst_30 {dimension_numbers = #tpu.dot_dimension_numbers<[1], [1], [0], [0], [0, 0, 1, 0], [], []>} : vector<16x32xbf16>, vector<16x32xbf16>, vector<16x16xf32> -> vector<16x16xf32>
    %99 = vector.extract_strided_slice %12 {offsets = [0, 32], sizes = [16, 32], strides = [1, 1]} : vector<16x128xbf16> to vector<16x32xbf16>
    %100 = vector.extract_strided_slice %17 {offsets = [0, 32], sizes = [16, 32], strides = [1, 1]} : vector<16x128xbf16> to vector<16x32xbf16>
    %cst_31 = arith.constant dense<0.000000e+00> : vector<16x16xf32>
    %101 = tpu.matmul %99, %100, %cst_31 {dimension_numbers = #tpu.dot_dimension_numbers<[1], [1], [0], [0], [0, 0, 1, 0], [], []>} : vector<16x32xbf16>, vector<16x32xbf16>, vector<16x16xf32> -> vector<16x16xf32>
    %c1_32 = arith.constant 1 : index
    %c0_33 = arith.constant 0 : index
    %102 = vector.load %arg9[%c1_32, %c0_33] : memref<17x128xf32, #tpu.memory_space<vmem>>, vector<16x16xf32>
    tpu.vector_store %arg9[%c1_32, %c0_33], %101 {strides = array<i32>} : memref<17x128xf32, #tpu.memory_space<vmem>>, vector<16x16xf32>,
    %c0_34 = arith.constant 0 : index
    %c17_35 = arith.constant 17 : index
    %103 = vector.load %arg9[%c0_34, %c17_35] : memref<17x128xf32, #tpu.memory_space<vmem>>, vector<16x16xf32>
    tpu.vector_store %arg9[%c0_34, %c17_35], %101 {strides = array<i32>} : memref<17x128xf32, #tpu.memory_space<vmem>>, vector<16x16xf32>,
    %c1_36 = arith.constant 1 : index
    %c0_37 = arith.constant 0 : index
    %104 = vector.load %arg9[%c1_36, %c0_37] : memref<17x128xf32, #tpu.memory_space<vmem>>, vector<16x128xf32>
    %105 = tpu.iota {dimensions = array<i32: 0>} : vector<16x127xi32>
    %c15_i32_38 = arith.constant 15 : i32
    %106 = vector.broadcast %c15_i32_38 : i32 to vector<16x127xi32>
    %107 = arith.subi %106, %105 : vector<16x127xi32>
    %c1_i32_39 = arith.constant 1 : i32
    %108 = vector.broadcast %c1_i32_39 : i32 to vector<16x127xi32>
    %109 = arith.andi %107, %108 : vector<16x127xi32>
    %c0_i32_40 = arith.constant 0 : i32
    %110 = vector.broadcast %c0_i32_40 : i32 to vector<16x127xi32>
    %111 = arith.cmpi ne, %109, %110 : vector<16x127xi32>
    %112 = vector.extract_strided_slice %104 {offsets = [0, 1], sizes = [16, 127], strides = [1, 1]} : vector<16x128xf32> to vector<16x127xf32>
    %113 = vector.extract_strided_slice %104 {offsets = [0, 0], sizes = [16, 127], strides = [1, 1]} : vector<16x128xf32> to vector<16x127xf32>
    %114 = arith.select %111, %112, %113 : vector<16x127xi1>, vector<16x127xf32>
    %115 = tpu.iota {dimensions = array<i32: 0>} : vector<16x125xi32>
    %c15_i32_41 = arith.constant 15 : i32
    %116 = vector.broadcast %c15_i32_41 : i32 to vector<16x125xi32>
    %117 = arith.subi %116, %115 : vector<16x125xi32>
    %c2_i32_42 = arith.constant 2 : i32
    %118 = vector.broadcast %c2_i32_42 : i32 to vector<16x125xi32>
    %119 = arith.andi %117, %118 : vector<16x125xi32>
    %c0_i32_43 = arith.constant 0 : i32
    %120 = vector.broadcast %c0_i32_43 : i32 to vector<16x125xi32>
    %121 = arith.cmpi ne, %119, %120 : vector<16x125xi32>
    %122 = vector.extract_strided_slice %114 {offsets = [0, 2], sizes = [16, 125], strides = [1, 1]} : vector<16x127xf32> to vector<16x125xf32>
    %123 = vector.extract_strided_slice %114 {offsets = [0, 0], sizes = [16, 125], strides = [1, 1]} : vector<16x127xf32> to vector<16x125xf32>
    %124 = arith.select %121, %122, %123 : vector<16x125xi1>, vector<16x125xf32>
    %125 = tpu.iota {dimensions = array<i32: 0>} : vector<16x121xi32>
    %c15_i32_44 = arith.constant 15 : i32
    %126 = vector.broadcast %c15_i32_44 : i32 to vector<16x121xi32>
    %127 = arith.subi %126, %125 : vector<16x121xi32>
    %c4_i32_45 = arith.constant 4 : i32
    %128 = vector.broadcast %c4_i32_45 : i32 to vector<16x121xi32>
    %129 = arith.andi %127, %128 : vector<16x121xi32>
    %c0_i32_46 = arith.constant 0 : i32
    %130 = vector.broadcast %c0_i32_46 : i32 to vector<16x121xi32>
    %131 = arith.cmpi ne, %129, %130 : vector<16x121xi32>
    %132 = vector.extract_strided_slice %124 {offsets = [0, 4], sizes = [16, 121], strides = [1, 1]} : vector<16x125xf32> to vector<16x121xf32>
    %133 = vector.extract_strided_slice %124 {offsets = [0, 0], sizes = [16, 121], strides = [1, 1]} : vector<16x125xf32> to vector<16x121xf32>
    %134 = arith.select %131, %132, %133 : vector<16x121xi1>, vector<16x121xf32>
    %135 = tpu.iota {dimensions = array<i32: 0>} : vector<16x113xi32>
    %c15_i32_47 = arith.constant 15 : i32
    %136 = vector.broadcast %c15_i32_47 : i32 to vector<16x113xi32>
    %137 = arith.subi %136, %135 : vector<16x113xi32>
    %c8_i32_48 = arith.constant 8 : i32
    %138 = vector.broadcast %c8_i32_48 : i32 to vector<16x113xi32>
    %139 = arith.andi %137, %138 : vector<16x113xi32>
    %c0_i32_49 = arith.constant 0 : i32
    %140 = vector.broadcast %c0_i32_49 : i32 to vector<16x113xi32>
    %141 = arith.cmpi ne, %139, %140 : vector<16x113xi32>
    %142 = vector.extract_strided_slice %134 {offsets = [0, 8], sizes = [16, 113], strides = [1, 1]} : vector<16x121xf32> to vector<16x113xf32>
    %143 = vector.extract_strided_slice %134 {offsets = [0, 0], sizes = [16, 113], strides = [1, 1]} : vector<16x121xf32> to vector<16x113xf32>
    %144 = arith.select %141, %142, %143 : vector<16x113xi1>, vector<16x113xf32>
    %145 = vector.extract_strided_slice %144 {offsets = [0, 0], sizes = [16, 16], strides = [1, 1]} : vector<16x113xf32> to vector<16x16xf32>
    %146 = arith.addf %98, %145 : vector<16x16xf32>
    %cst_50 = arith.constant 0.176776692 : f32
    %147 = vector.broadcast %cst_50 : f32 to vector<16x16xf32>
    %148 = arith.mulf %146, %147 : vector<16x16xf32>
    %149 = vector.broadcast %25 : vector<1x16xf32> to vector<16x16xf32>
    %150 = arith.addf %148, %149 : vector<16x16xf32>
    %cst_51 = arith.constant dense<0xFF800000> : vector<16xf32>
    %151 = vector.multi_reduction <maximumf>, %150, %cst_51 [1] : vector<16x16xf32> to vector<16xf32>
    %152 = vector.shape_cast %151 : vector<16xf32> to vector<16x1xf32>
    %153 = vector.broadcast %152 : vector<16x1xf32> to vector<16x16xf32>
    %154 = arith.subf %150, %153 : vector<16x16xf32>
    %155 = math.exp %154 : vector<16x16xf32>
    %cst_52 = arith.constant dense<0.000000e+00> : vector<16xf32>
    %156 = vector.multi_reduction <add>, %155, %cst_52 [1] : vector<16x16xf32> to vector<16xf32>
    %157 = vector.shape_cast %156 : vector<16xf32> to vector<16x1xf32>
    %158 = tpu.reciprocal %157 {approx = true} : vector<16x1xf32> -> vector<16x1xf32>
    %159 = vector.broadcast %158 : vector<16x1xf32> to vector<16x16xf32>
    %160 = arith.mulf %155, %159 : vector<16x16xf32>
    %161 = arith.truncf %160 : vector<16x16xf32> to vector<16x16xbf16>
    %162 = vector.extract_strided_slice %16 {offsets = [0, 32], sizes = [16, 32], strides = [1, 1]} : vector<16x128xbf16> to vector<16x32xbf16>
    %cst_53 = arith.constant dense<0.000000e+00> : vector<16x32xf32>
    %163 = tpu.matmul %161, %162, %cst_53 {dimension_numbers = #tpu.dot_dimension_numbers<[1], [0], [0], [1], [0, 0, 1, 1], [], []>} : vector<16x16xbf16>, vector<16x32xbf16>, vector<16x32xf32> -> vector<16x32xf32>
    %164 = vector.extract_strided_slice %8 {offsets = [0, 64], sizes = [16, 32], strides = [1, 1]} : vector<16x128xbf16> to vector<16x32xbf16>
    %165 = vector.extract_strided_slice %14 {offsets = [0, 64], sizes = [16, 32], strides = [1, 1]} : vector<16x128xbf16> to vector<16x32xbf16>
    %cst_54 = arith.constant dense<0.000000e+00> : vector<16x16xf32>
    %166 = tpu.matmul %164, %165, %cst_54 {dimension_numbers = #tpu.dot_dimension_numbers<[1], [1], [0], [0], [0, 0, 1, 0], [], []>} : vector<16x32xbf16>, vector<16x32xbf16>, vector<16x16xf32> -> vector<16x16xf32>
    %167 = vector.extract_strided_slice %12 {offsets = [0, 64], sizes = [16, 32], strides = [1, 1]} : vector<16x128xbf16> to vector<16x32xbf16>
    %168 = vector.extract_strided_slice %17 {offsets = [0, 64], sizes = [16, 32], strides = [1, 1]} : vector<16x128xbf16> to vector<16x32xbf16>
    %cst_55 = arith.constant dense<0.000000e+00> : vector<16x16xf32>
    %169 = tpu.matmul %167, %168, %cst_55 {dimension_numbers = #tpu.dot_dimension_numbers<[1], [1], [0], [0], [0, 0, 1, 0], [], []>} : vector<16x32xbf16>, vector<16x32xbf16>, vector<16x16xf32> -> vector<16x16xf32>
    %c1_56 = arith.constant 1 : index
    %c0_57 = arith.constant 0 : index
    %170 = vector.load %arg9[%c1_56, %c0_57] : memref<17x128xf32, #tpu.memory_space<vmem>>, vector<16x16xf32>
    tpu.vector_store %arg9[%c1_56, %c0_57], %169 {strides = array<i32>} : memref<17x128xf32, #tpu.memory_space<vmem>>, vector<16x16xf32>,
    %c0_58 = arith.constant 0 : index
    %c17_59 = arith.constant 17 : index
    %171 = vector.load %arg9[%c0_58, %c17_59] : memref<17x128xf32, #tpu.memory_space<vmem>>, vector<16x16xf32>
    tpu.vector_store %arg9[%c0_58, %c17_59], %169 {strides = array<i32>} : memref<17x128xf32, #tpu.memory_space<vmem>>, vector<16x16xf32>,
    %c1_60 = arith.constant 1 : index
    %c0_61 = arith.constant 0 : index
    %172 = vector.load %arg9[%c1_60, %c0_61] : memref<17x128xf32, #tpu.memory_space<vmem>>, vector<16x128xf32>
    %173 = tpu.iota {dimensions = array<i32: 0>} : vector<16x127xi32>
    %c15_i32_62 = arith.constant 15 : i32
    %174 = vector.broadcast %c15_i32_62 : i32 to vector<16x127xi32>
    %175 = arith.subi %174, %173 : vector<16x127xi32>
    %c1_i32_63 = arith.constant 1 : i32
    %176 = vector.broadcast %c1_i32_63 : i32 to vector<16x127xi32>
    %177 = arith.andi %175, %176 : vector<16x127xi32>
    %c0_i32_64 = arith.constant 0 : i32
    %178 = vector.broadcast %c0_i32_64 : i32 to vector<16x127xi32>
    %179 = arith.cmpi ne, %177, %178 : vector<16x127xi32>
    %180 = vector.extract_strided_slice %172 {offsets = [0, 1], sizes = [16, 127], strides = [1, 1]} : vector<16x128xf32> to vector<16x127xf32>
    %181 = vector.extract_strided_slice %172 {offsets = [0, 0], sizes = [16, 127], strides = [1, 1]} : vector<16x128xf32> to vector<16x127xf32>
    %182 = arith.select %179, %180, %181 : vector<16x127xi1>, vector<16x127xf32>
    %183 = tpu.iota {dimensions = array<i32: 0>} : vector<16x125xi32>
    %c15_i32_65 = arith.constant 15 : i32
    %184 = vector.broadcast %c15_i32_65 : i32 to vector<16x125xi32>
    %185 = arith.subi %184, %183 : vector<16x125xi32>
    %c2_i32_66 = arith.constant 2 : i32
    %186 = vector.broadcast %c2_i32_66 : i32 to vector<16x125xi32>
    %187 = arith.andi %185, %186 : vector<16x125xi32>
    %c0_i32_67 = arith.constant 0 : i32
    %188 = vector.broadcast %c0_i32_67 : i32 to vector<16x125xi32>
    %189 = arith.cmpi ne, %187, %188 : vector<16x125xi32>
    %190 = vector.extract_strided_slice %182 {offsets = [0, 2], sizes = [16, 125], strides = [1, 1]} : vector<16x127xf32> to vector<16x125xf32>
    %191 = vector.extract_strided_slice %182 {offsets = [0, 0], sizes = [16, 125], strides = [1, 1]} : vector<16x127xf32> to vector<16x125xf32>
    %192 = arith.select %189, %190, %191 : vector<16x125xi1>, vector<16x125xf32>
    %193 = tpu.iota {dimensions = array<i32: 0>} : vector<16x121xi32>
    %c15_i32_68 = arith.constant 15 : i32
    %194 = vector.broadcast %c15_i32_68 : i32 to vector<16x121xi32>
    %195 = arith.subi %194, %193 : vector<16x121xi32>
    %c4_i32_69 = arith.constant 4 : i32
    %196 = vector.broadcast %c4_i32_69 : i32 to vector<16x121xi32>
    %197 = arith.andi %195, %196 : vector<16x121xi32>
    %c0_i32_70 = arith.constant 0 : i32
    %198 = vector.broadcast %c0_i32_70 : i32 to vector<16x121xi32>
    %199 = arith.cmpi ne, %197, %198 : vector<16x121xi32>
    %200 = vector.extract_strided_slice %192 {offsets = [0, 4], sizes = [16, 121], strides = [1, 1]} : vector<16x125xf32> to vector<16x121xf32>
    %201 = vector.extract_strided_slice %192 {offsets = [0, 0], sizes = [16, 121], strides = [1, 1]} : vector<16x125xf32> to vector<16x121xf32>
    %202 = arith.select %199, %200, %201 : vector<16x121xi1>, vector<16x121xf32>
    %203 = tpu.iota {dimensions = array<i32: 0>} : vector<16x113xi32>
    %c15_i32_71 = arith.constant 15 : i32
    %204 = vector.broadcast %c15_i32_71 : i32 to vector<16x113xi32>
    %205 = arith.subi %204, %203 : vector<16x113xi32>
    %c8_i32_72 = arith.constant 8 : i32
    %206 = vector.broadcast %c8_i32_72 : i32 to vector<16x113xi32>
    %207 = arith.andi %205, %206 : vector<16x113xi32>
    %c0_i32_73 = arith.constant 0 : i32
    %208 = vector.broadcast %c0_i32_73 : i32 to vector<16x113xi32>
    %209 = arith.cmpi ne, %207, %208 : vector<16x113xi32>
    %210 = vector.extract_strided_slice %202 {offsets = [0, 8], sizes = [16, 113], strides = [1, 1]} : vector<16x121xf32> to vector<16x113xf32>
    %211 = vector.extract_strided_slice %202 {offsets = [0, 0], sizes = [16, 113], strides = [1, 1]} : vector<16x121xf32> to vector<16x113xf32>
    %212 = arith.select %209, %210, %211 : vector<16x113xi1>, vector<16x113xf32>
    %213 = vector.extract_strided_slice %212 {offsets = [0, 0], sizes = [16, 16], strides = [1, 1]} : vector<16x113xf32> to vector<16x16xf32>
    %214 = arith.addf %166, %213 : vector<16x16xf32>
    %cst_74 = arith.constant 0.176776692 : f32
    %215 = vector.broadcast %cst_74 : f32 to vector<16x16xf32>
    %216 = arith.mulf %214, %215 : vector<16x16xf32>
    %217 = vector.broadcast %25 : vector<1x16xf32> to vector<16x16xf32>
    %218 = arith.addf %216, %217 : vector<16x16xf32>
    %cst_75 = arith.constant dense<0xFF800000> : vector<16xf32>
    %219 = vector.multi_reduction <maximumf>, %218, %cst_75 [1] : vector<16x16xf32> to vector<16xf32>
    %220 = vector.shape_cast %219 : vector<16xf32> to vector<16x1xf32>
    %221 = vector.broadcast %220 : vector<16x1xf32> to vector<16x16xf32>
    %222 = arith.subf %218, %221 : vector<16x16xf32>
    %223 = math.exp %222 : vector<16x16xf32>
    %cst_76 = arith.constant dense<0.000000e+00> : vector<16xf32>
    %224 = vector.multi_reduction <add>, %223, %cst_76 [1] : vector<16x16xf32> to vector<16xf32>
    %225 = vector.shape_cast %224 : vector<16xf32> to vector<16x1xf32>
    %226 = tpu.reciprocal %225 {approx = true} : vector<16x1xf32> -> vector<16x1xf32>
    %227 = vector.broadcast %226 : vector<16x1xf32> to vector<16x16xf32>
    %228 = arith.mulf %223, %227 : vector<16x16xf32>
    %229 = arith.truncf %228 : vector<16x16xf32> to vector<16x16xbf16>
    %230 = vector.extract_strided_slice %16 {offsets = [0, 64], sizes = [16, 32], strides = [1, 1]} : vector<16x128xbf16> to vector<16x32xbf16>
    %cst_77 = arith.constant dense<0.000000e+00> : vector<16x32xf32>
    %231 = tpu.matmul %229, %230, %cst_77 {dimension_numbers = #tpu.dot_dimension_numbers<[1], [0], [0], [1], [0, 0, 1, 1], [], []>} : vector<16x16xbf16>, vector<16x32xbf16>, vector<16x32xf32> -> vector<16x32xf32>
    %232 = vector.extract_strided_slice %8 {offsets = [0, 96], sizes = [16, 32], strides = [1, 1]} : vector<16x128xbf16> to vector<16x32xbf16>
    %233 = vector.extract_strided_slice %14 {offsets = [0, 96], sizes = [16, 32], strides = [1, 1]} : vector<16x128xbf16> to vector<16x32xbf16>
    %cst_78 = arith.constant dense<0.000000e+00> : vector<16x16xf32>
    %234 = tpu.matmul %232, %233, %cst_78 {dimension_numbers = #tpu.dot_dimension_numbers<[1], [1], [0], [0], [0, 0, 1, 0], [], []>} : vector<16x32xbf16>, vector<16x32xbf16>, vector<16x16xf32> -> vector<16x16xf32>
    %235 = vector.extract_strided_slice %12 {offsets = [0, 96], sizes = [16, 32], strides = [1, 1]} : vector<16x128xbf16> to vector<16x32xbf16>
    %236 = vector.extract_strided_slice %17 {offsets = [0, 96], sizes = [16, 32], strides = [1, 1]} : vector<16x128xbf16> to vector<16x32xbf16>
    %cst_79 = arith.constant dense<0.000000e+00> : vector<16x16xf32>
    %237 = tpu.matmul %235, %236, %cst_79 {dimension_numbers = #tpu.dot_dimension_numbers<[1], [1], [0], [0], [0, 0, 1, 0], [], []>} : vector<16x32xbf16>, vector<16x32xbf16>, vector<16x16xf32> -> vector<16x16xf32>
    %c1_80 = arith.constant 1 : index
    %c0_81 = arith.constant 0 : index
    %238 = vector.load %arg9[%c1_80, %c0_81] : memref<17x128xf32, #tpu.memory_space<vmem>>, vector<16x16xf32>
    tpu.vector_store %arg9[%c1_80, %c0_81], %237 {strides = array<i32>} : memref<17x128xf32, #tpu.memory_space<vmem>>, vector<16x16xf32>,
    %c0_82 = arith.constant 0 : index
    %c17_83 = arith.constant 17 : index
    %239 = vector.load %arg9[%c0_82, %c17_83] : memref<17x128xf32, #tpu.memory_space<vmem>>, vector<16x16xf32>
    tpu.vector_store %arg9[%c0_82, %c17_83], %237 {strides = array<i32>} : memref<17x128xf32, #tpu.memory_space<vmem>>, vector<16x16xf32>,
    %c1_84 = arith.constant 1 : index
    %c0_85 = arith.constant 0 : index
    %240 = vector.load %arg9[%c1_84, %c0_85] : memref<17x128xf32, #tpu.memory_space<vmem>>, vector<16x128xf32>
    %241 = tpu.iota {dimensions = array<i32: 0>} : vector<16x127xi32>
    %c15_i32_86 = arith.constant 15 : i32
    %242 = vector.broadcast %c15_i32_86 : i32 to vector<16x127xi32>
    %243 = arith.subi %242, %241 : vector<16x127xi32>
    %c1_i32_87 = arith.constant 1 : i32
    %244 = vector.broadcast %c1_i32_87 : i32 to vector<16x127xi32>
    %245 = arith.andi %243, %244 : vector<16x127xi32>
    %c0_i32_88 = arith.constant 0 : i32
    %246 = vector.broadcast %c0_i32_88 : i32 to vector<16x127xi32>
    %247 = arith.cmpi ne, %245, %246 : vector<16x127xi32>
    %248 = vector.extract_strided_slice %240 {offsets = [0, 1], sizes = [16, 127], strides = [1, 1]} : vector<16x128xf32> to vector<16x127xf32>
    %249 = vector.extract_strided_slice %240 {offsets = [0, 0], sizes = [16, 127], strides = [1, 1]} : vector<16x128xf32> to vector<16x127xf32>
    %250 = arith.select %247, %248, %249 : vector<16x127xi1>, vector<16x127xf32>
    %251 = tpu.iota {dimensions = array<i32: 0>} : vector<16x125xi32>
    %c15_i32_89 = arith.constant 15 : i32
    %252 = vector.broadcast %c15_i32_89 : i32 to vector<16x125xi32>
    %253 = arith.subi %252, %251 : vector<16x125xi32>
    %c2_i32_90 = arith.constant 2 : i32
    %254 = vector.broadcast %c2_i32_90 : i32 to vector<16x125xi32>
    %255 = arith.andi %253, %254 : vector<16x125xi32>
    %c0_i32_91 = arith.constant 0 : i32
    %256 = vector.broadcast %c0_i32_91 : i32 to vector<16x125xi32>
    %257 = arith.cmpi ne, %255, %256 : vector<16x125xi32>
    %258 = vector.extract_strided_slice %250 {offsets = [0, 2], sizes = [16, 125], strides = [1, 1]} : vector<16x127xf32> to vector<16x125xf32>
    %259 = vector.extract_strided_slice %250 {offsets = [0, 0], sizes = [16, 125], strides = [1, 1]} : vector<16x127xf32> to vector<16x125xf32>
    %260 = arith.select %257, %258, %259 : vector<16x125xi1>, vector<16x125xf32>
    %261 = tpu.iota {dimensions = array<i32: 0>} : vector<16x121xi32>
    %c15_i32_92 = arith.constant 15 : i32
    %262 = vector.broadcast %c15_i32_92 : i32 to vector<16x121xi32>
    %263 = arith.subi %262, %261 : vector<16x121xi32>
    %c4_i32_93 = arith.constant 4 : i32
    %264 = vector.broadcast %c4_i32_93 : i32 to vector<16x121xi32>
    %265 = arith.andi %263, %264 : vector<16x121xi32>
    %c0_i32_94 = arith.constant 0 : i32
    %266 = vector.broadcast %c0_i32_94 : i32 to vector<16x121xi32>
    %267 = arith.cmpi ne, %265, %266 : vector<16x121xi32>
    %268 = vector.extract_strided_slice %260 {offsets = [0, 4], sizes = [16, 121], strides = [1, 1]} : vector<16x125xf32> to vector<16x121xf32>
    %269 = vector.extract_strided_slice %260 {offsets = [0, 0], sizes = [16, 121], strides = [1, 1]} : vector<16x125xf32> to vector<16x121xf32>
    %270 = arith.select %267, %268, %269 : vector<16x121xi1>, vector<16x121xf32>
    %271 = tpu.iota {dimensions = array<i32: 0>} : vector<16x113xi32>
    %c15_i32_95 = arith.constant 15 : i32
    %272 = vector.broadcast %c15_i32_95 : i32 to vector<16x113xi32>
    %273 = arith.subi %272, %271 : vector<16x113xi32>
    %c8_i32_96 = arith.constant 8 : i32
    %274 = vector.broadcast %c8_i32_96 : i32 to vector<16x113xi32>
    %275 = arith.andi %273, %274 : vector<16x113xi32>
    %c0_i32_97 = arith.constant 0 : i32
    %276 = vector.broadcast %c0_i32_97 : i32 to vector<16x113xi32>
    %277 = arith.cmpi ne, %275, %276 : vector<16x113xi32>
    %278 = vector.extract_strided_slice %270 {offsets = [0, 8], sizes = [16, 113], strides = [1, 1]} : vector<16x121xf32> to vector<16x113xf32>
    %279 = vector.extract_strided_slice %270 {offsets = [0, 0], sizes = [16, 113], strides = [1, 1]} : vector<16x121xf32> to vector<16x113xf32>
    %280 = arith.select %277, %278, %279 : vector<16x113xi1>, vector<16x113xf32>
    %281 = vector.extract_strided_slice %280 {offsets = [0, 0], sizes = [16, 16], strides = [1, 1]} : vector<16x113xf32> to vector<16x16xf32>
    %282 = arith.addf %234, %281 : vector<16x16xf32>
    %cst_98 = arith.constant 0.176776692 : f32
    %283 = vector.broadcast %cst_98 : f32 to vector<16x16xf32>
    %284 = arith.mulf %282, %283 : vector<16x16xf32>
    %285 = vector.broadcast %25 : vector<1x16xf32> to vector<16x16xf32>
    %286 = arith.addf %284, %285 : vector<16x16xf32>
    %cst_99 = arith.constant dense<0xFF800000> : vector<16xf32>
    %287 = vector.multi_reduction <maximumf>, %286, %cst_99 [1] : vector<16x16xf32> to vector<16xf32>
    %288 = vector.shape_cast %287 : vector<16xf32> to vector<16x1xf32>
    %289 = vector.broadcast %288 : vector<16x1xf32> to vector<16x16xf32>
    %290 = arith.subf %286, %289 : vector<16x16xf32>
    %291 = math.exp %290 : vector<16x16xf32>
    %cst_100 = arith.constant dense<0.000000e+00> : vector<16xf32>
    %292 = vector.multi_reduction <add>, %291, %cst_100 [1] : vector<16x16xf32> to vector<16xf32>
    %293 = vector.shape_cast %292 : vector<16xf32> to vector<16x1xf32>
    %294 = tpu.reciprocal %293 {approx = true} : vector<16x1xf32> -> vector<16x1xf32>
    %295 = vector.broadcast %294 : vector<16x1xf32> to vector<16x16xf32>
    %296 = arith.mulf %291, %295 : vector<16x16xf32>
    %297 = arith.truncf %296 : vector<16x16xf32> to vector<16x16xbf16>
    %298 = vector.extract_strided_slice %16 {offsets = [0, 96], sizes = [16, 32], strides = [1, 1]} : vector<16x128xbf16> to vector<16x32xbf16>
    %cst_101 = arith.constant dense<0.000000e+00> : vector<16x32xf32>
    %299 = tpu.matmul %297, %298, %cst_101 {dimension_numbers = #tpu.dot_dimension_numbers<[1], [0], [0], [1], [0, 0, 1, 1], [], []>} : vector<16x16xbf16>, vector<16x32xbf16>, vector<16x32xf32> -> vector<16x32xf32>
    %300 = tpu.concatenate %95, %163, %231, %299 in 1 : vector<16x32xf32>, vector<16x32xf32>, vector<16x32xf32>, vector<16x32xf32> -> vector<16x128xf32>
    %c0_102 = arith.constant 0 : index
    %c0_103 = arith.constant 0 : index
    %301 = vector.load %arg5[%c0_102, %c0_103] : memref<128x128xf32, #tpu.memory_space<vmem>>, vector<128x128xf32>
    %cst_104 = arith.constant dense<0.000000e+00> : vector<16x128xf32>
    %302 = tpu.matmul %300, %301, %cst_104 {dimension_numbers = #tpu.dot_dimension_numbers<[1], [0], [0], [1], [0, 0, 1, 1], [], []>} : vector<16x128xf32>, vector<128x128xf32>, vector<16x128xf32> -> vector<16x128xf32>
    %c0_105 = arith.constant 0 : index
    %c0_106 = arith.constant 0 : index
    %c0_107 = arith.constant 0 : index
    %303 = vector.load %arg8[%c0_105, %c0_106, %c0_107] : memref<1x16x128xf32, #tpu.memory_space<vmem>>, vector<1x16x128xf32>
    %304 = vector.shape_cast %303 : vector<1x16x128xf32> to vector<16x128xf32>
    %305 = vector.shape_cast %302 : vector<16x128xf32> to vector<1x16x128xf32>
    tpu.vector_store %arg8[%c0_105, %c0_106, %c0_107], %305 {strides = array<i32>} : memref<1x16x128xf32, #tpu.memory_space<vmem>>, vector<1x16x128xf32>,
    return
  }
  func.func @transform_0(%arg0: i32, %arg1: memref<2xi32, #tpu.memory_space<smem>>) -> (i32, i32, i32) {
    %c0_i32 = arith.constant 0 : i32
    %c0_i32_0 = arith.constant 0 : i32
    %c0_i32_1 = arith.constant 0 : i32
    return %arg0, %c0_i32, %c0_i32_0 : i32, i32, i32
  }
  func.func @transform_1(%arg0: i32, %arg1: memref<2xi32, #tpu.memory_space<smem>>) -> (i32, i32) {
    %c0_i32 = arith.constant 0 : i32
    %c0_i32_0 = arith.constant 0 : i32
    %c0_i32_1 = arith.constant 0 : i32
    return %c0_i32, %c0_i32_0 : i32, i32
  }
  func.func @transform_2(%arg0: i32, %arg1: memref<2xi32, #tpu.memory_space<smem>>) -> (i32, i32) {
    %c0_i32 = arith.constant 0 : i32
    %c0_i32_0 = arith.constant 0 : i32
    %c0_i32_1 = arith.constant 0 : i32
    return %c0_i32, %c0_i32_0 : i32, i32
  }
  func.func @transform_3(%arg0: i32, %arg1: memref<2xi32, #tpu.memory_space<smem>>) -> (i32, i32) {
    %c0_i32 = arith.constant 0 : i32
    %c0_i32_0 = arith.constant 0 : i32
    %c0_i32_1 = arith.constant 0 : i32
    return %c0_i32, %c0_i32_0 : i32, i32
  }
  func.func @transform_4(%arg0: i32, %arg1: memref<2xi32, #tpu.memory_space<smem>>) -> (i32, i32) {
    %c0_i32 = arith.constant 0 : i32
    %c0_i32_0 = arith.constant 0 : i32
    %c0_i32_1 = arith.constant 0 : i32
    return %c0_i32, %c0_i32_0 : i32, i32
  }
  func.func @transform_5(%arg0: i32, %arg1: memref<2xi32, #tpu.memory_space<smem>>) -> (i32, i32) {
    %c0_i32 = arith.constant 0 : i32
    %c0_i32_0 = arith.constant 0 : i32
    %c0_i32_1 = arith.constant 0 : i32
    return %c0_i32, %c0_i32_0 : i32, i32
  }
  func.func @transform_6(%arg0: i32, %arg1: memref<2xi32, #tpu.memory_space<smem>>) -> (i32, i32, i32) {
    %c0_i32 = arith.constant 0 : i32
    %c0_i32_0 = arith.constant 0 : i32
    %c0_i32_1 = arith.constant 0 : i32
    return %arg0, %c0_i32, %c0_i32_0 : i32, i32, i32
  }
}

</mosaic_0001>

<llo_original>
// kernel: rel_position_mha.1
$region0: #{rel_position_mha.1}
  #allocation0 [shape = 'u32[]', space=smem, size = 0x4, offset = 0x4, fixed_abs, tag = 'smem constant byte address 0x4 - core index']
  #allocation1 [shape = 'u32[144,128]{1,0:T(1,128)}', space=vmem, size = 0x12000, scoped, tag = 'internal scratch']
  #allocation2 [shape = 'f32[17,128]{1,0:T(8,128)}', space=vmem, size = 0x3000, scoped, tag = 'scratch operand']
  #allocation3 [shape = 's32[1]{0}', space=sflag, size = 0x4, scoped, tag = 'scoped memory for rel_position_mha.1']
  #allocation4 [shape = 'u8[512]{0}', space=smem, size = 0x200, scoped, tag = 'prefetched SMEM operand 0']
  %s0 = inlined_call_operand.vmem [shape: s32[2], index: 0, kind: input, shape index: {}]
  %s1 = inlined_call_operand.vmem [shape: f32[2,16,128], index: 1, kind: input, shape index: {}]
  %s2 = inlined_call_operand.vmem [shape: f32[128,384], index: 2, kind: input, shape index: {}]
  %s3 = inlined_call_operand.vmem [shape: bf16[16,128], index: 3, kind: input, shape index: {}]
  %s4 = inlined_call_operand.vmem [shape: f32[128,128], index: 4, kind: input, shape index: {}]
  %s5 = inlined_call_operand.vmem [shape: f32[1,128], index: 5, kind: input, shape index: {}]
  %s6 = inlined_call_operand.vmem [shape: f32[1,128], index: 6, kind: input, shape index: {}]
  %s7 = inlined_call_operand.hbm [shape: f32[2,16,128], index: 7, kind: output, shape index: {}]
  %s8 = sld [smem:[#allocation0]]
  $region57: #{rel_position_mha.1} parent=0
    _
  %s10 = ssub.s32 1, %s8
  %s11 = scalar_select 0, %s10, %s8
  %s12 = sshll.u32 %s0, 4
  %s13 = int_to_ptr.vmem [resolvable:$true] %s12
  %15 = dma.vmem_to_smem %s13, 16, [#allocation4], [#allocation3]
  %16 = dma.done [#allocation3], 16
  %17 = sfence
  $region1: #{rel_position_mha.1} parent=0
    #allocation5 [shape = 'u8[16384]{0}', space=vmem, size = 0x4000, scoped, tag = 'output window, operand 0']
    #allocation6 [shape = 's32[2]{0}', space=sflag, size = 0x8, scoped, tag = 'scoped memory for rel_position_mha.1']
    %18 = vsyncpa [#allocation6], 0
    %s19 = scalar_lea.sflag [#allocation6], 1
    %20 = vsyncpa %s19, 0
    loop: start=0, step=1, limit=4
    $region2: #{rel_position_mha.1} parent=1 // loop_pre_header
      _
    $region3: #{rel_position_mha.1} parent=1 // loop_header
      %s22 = sphi 0, %s26
      %p23 = scmp.ge.s32.totalorder %s22, 4
      %s32 = sphi 0, %s34
      %s35 = sphi 0, %s32
      %s36 = sphi 0, %s35
      %s52 = sphi 0, %s36
      %s56 = sphi 0, %s56
      %s58 = sphi 0, %s56
      %s59 = sphi 0, %s58
      %s73 = sphi 0, %s59
      %s77 = sphi 0, %s77
      %s79 = sphi 0, %s77
      %s80 = sphi 0, %s79
      %s94 = sphi 0, %s80
      %s98 = sphi 0, %s98
      %s100 = sphi 0, %s98
      %s101 = sphi 0, %s100
      %s115 = sphi 0, %s101
      %s119 = sphi 0, %s119
      %s121 = sphi 0, %s119
      %s122 = sphi 0, %s121
      %s136 = sphi 0, %s122
      %s140 = sphi 0, %s140
      %s142 = sphi 0, %s140
      %s143 = sphi 0, %s142
      %s157 = sphi 0, %s143
      %s163 = sphi 0, %s165
      %s166 = sphi 0, %s163
      %s167 = sphi 0, %s166
      %s183 = sphi 0, %s167
    $region4: #{rel_position_mha.1} parent=1 // loop_header_branch
      %25 = sbr.rel (%p23) target = $region8
    $region5: #{rel_position_mha.1} parent=1 // loop_body
      %s27 = ssub.s32 %s22, 1
      %s28 = ssub.s32 %s22, 2
      %s29 = sadd.s32 %s22, 1
      %s30 = ssub.s32 %s22, %s29
      %p31 = scmp.eq.s32.totalorder %s30, 0
      %s33 = sadd.s32 %s32, 1
      %s34 = scalar_select %p31, %s32, %s33
      %p37 = pneg %p31
      %p38 = scmp.eq.s32.totalorder %s22, 1
      %p39 = por %p37, %p38
      %p40 = scmp.ne.s32.totalorder %s32, %s35
      %p41 = scmp.eq.s32.totalorder %s22, 0
      %p42 = por %p40, %p41
      %p43 = scmp.ne.s32.totalorder %s32, %s35
      %p44 = scmp.eq.s32.totalorder %s27, 1
      %p45 = por %p43, %p44
      %p46 = scmp.ne.s32.totalorder %s35, %s36
      %p47 = scmp.eq.s32.totalorder %s27, 0
      %p48 = por %p46, %p47
      %p49 = scmp.ne.s32.totalorder %s35, %s36
      %p50 = scmp.eq.s32.totalorder %s28, 1
      %p51 = por %p49, %p50
      %p53 = scmp.ne.s32.totalorder %s36, %s52
      %p54 = scmp.eq.s32.totalorder %s28, 0
      %p55 = por %p53, %p54
      %s57 = sadd.s32 %s56, 1
      %p60 = scmp.eq.s32.totalorder %s22, 1
      %p61 = scmp.ne.s32.totalorder %s56, %s58
      %p62 = scmp.eq.s32.totalorder %s22, 0
      %p63 = por %p61, %p62
      %p64 = scmp.ne.s32.totalorder %s56, %s58
      %p65 = scmp.eq.s32.totalorder %s27, 1
      %p66 = por %p64, %p65
      %p67 = scmp.ne.s32.totalorder %s58, %s59
      %p68 = scmp.eq.s32.totalorder %s27, 0
      %p69 = por %p67, %p68
      %p70 = scmp.ne.s32.totalorder %s58, %s59
      %p71 = scmp.eq.s32.totalorder %s28, 1
      %p72 = por %p70, %p71
      %p74 = scmp.ne.s32.totalorder %s59, %s73
      %p75 = scmp.eq.s32.totalorder %s28, 0
      %p76 = por %p74, %p75
      %s78 = sadd.s32 %s77, 1
      %p81 = scmp.eq.s32.totalorder %s22, 1
      %p82 = scmp.ne.s32.totalorder %s77, %s79
      %p83 = scmp.eq.s32.totalorder %s22, 0
      %p84 = por %p82, %p83
      %p85 = scmp.ne.s32.totalorder %s77, %s79
      %p86 = scmp.eq.s32.totalorder %s27, 1
      %p87 = por %p85, %p86
      %p88 = scmp.ne.s32.totalorder %s79, %s80
      %p89 = scmp.eq.s32.totalorder %s27, 0
      %p90 = por %p88, %p89
      %p91 = scmp.ne.s32.totalorder %s79, %s80
      %p92 = scmp.eq.s32.totalorder %s28, 1
      %p93 = por %p91, %p92
      %p95 = scmp.ne.s32.totalorder %s80, %s94
      %p96 = scmp.eq.s32.totalorder %s28, 0
      %p97 = por %p95, %p96
      %s99 = sadd.s32 %s98, 1
      %p102 = scmp.eq.s32.totalorder %s22, 1
      %p103 = scmp.ne.s32.totalorder %s98, %s100
      %p104 = scmp.eq.s32.totalorder %s22, 0
      %p105 = por %p103, %p104
      %p106 = scmp.ne.s32.totalorder %s98, %s100
      %p107 = scmp.eq.s32.totalorder %s27, 1
      %p108 = por %p106, %p107
      %p109 = scmp.ne.s32.totalorder %s100, %s101
      %p110 = scmp.eq.s32.totalorder %s27, 0
      %p111 = por %p109, %p110
      %p112 = scmp.ne.s32.totalorder %s100, %s101
      %p113 = scmp.eq.s32.totalorder %s28, 1
      %p114 = por %p112, %p113
      %p116 = scmp.ne.s32.totalorder %s101, %s115
      %p117 = scmp.eq.s32.totalorder %s28, 0
      %p118 = por %p116, %p117
      %s120 = sadd.s32 %s119, 1
      %p123 = scmp.eq.s32.totalorder %s22, 1
      %p124 = scmp.ne.s32.totalorder %s119, %s121
      %p125 = scmp.eq.s32.totalorder %s22, 0
      %p126 = por %p124, %p125
      %p127 = scmp.ne.s32.totalorder %s119, %s121
      %p128 = scmp.eq.s32.totalorder %s27, 1
      %p129 = por %p127, %p128
      %p130 = scmp.ne.s32.totalorder %s121, %s122
      %p131 = scmp.eq.s32.totalorder %s27, 0
      %p132 = por %p130, %p131
      %p133 = scmp.ne.s32.totalorder %s121, %s122
      %p134 = scmp.eq.s32.totalorder %s28, 1
      %p135 = por %p133, %p134
      %p137 = scmp.ne.s32.totalorder %s122, %s136
      %p138 = scmp.eq.s32.totalorder %s28, 0
      %p139 = por %p137, %p138
      %s141 = sadd.s32 %s140, 1
      %p144 = scmp.eq.s32.totalorder %s22, 1
      %p145 = scmp.ne.s32.totalorder %s140, %s142
      %p146 = scmp.eq.s32.totalorder %s22, 0
      %p147 = por %p145, %p146
      %p148 = scmp.ne.s32.totalorder %s140, %s142
      %p149 = scmp.eq.s32.totalorder %s27, 1
      %p150 = por %p148, %p149
      %p151 = scmp.ne.s32.totalorder %s142, %s143
      %p152 = scmp.eq.s32.totalorder %s27, 0
      %p153 = por %p151, %p152
      %p154 = scmp.ne.s32.totalorder %s142, %s143
      %p155 = scmp.eq.s32.totalorder %s28, 1
      %p156 = por %p154, %p155
      %p158 = scmp.ne.s32.totalorder %s143, %s157
      %p159 = scmp.eq.s32.totalorder %s28, 0
      %p160 = por %p158, %p159
      %s161 = ssub.s32 %s22, %s29
      %p162 = scmp.eq.s32.totalorder %s161, 0
      %s164 = sadd.s32 %s163, 1
      %s165 = scalar_select %p162, %s163, %s164
      %p168 = pneg %p162
      %p169 = scmp.eq.s32.totalorder %s22, 1
      %p170 = por %p168, %p169
      %p171 = scmp.ne.s32.totalorder %s163, %s166
      %p172 = scmp.eq.s32.totalorder %s22, 0
      %p173 = por %p171, %p172
      %p174 = scmp.ne.s32.totalorder %s163, %s166
      %p175 = scmp.eq.s32.totalorder %s27, 1
      %p176 = por %p174, %p175
      %p177 = scmp.ne.s32.totalorder %s166, %s167
      %p178 = scmp.eq.s32.totalorder %s27, 0
      %p179 = por %p177, %p178
      %p180 = scmp.ne.s32.totalorder %s166, %s167
      %p181 = scmp.eq.s32.totalorder %s28, 1
      %p182 = por %p180, %p181
      %p184 = scmp.ne.s32.totalorder %s167, %s183
      %p185 = scmp.eq.s32.totalorder %s28, 0
      %p186 = por %p184, %p185
      %p187 = scmp.le.s32.totalorder 1, %s22
      %p188 = scmp.lt.s32.totalorder %s22, 3
      %p189 = pnand %p187, %p188
      %p190 = pneg %p189
      // Predicated region
      $region9: #{rel_position_mha.1} parent=5 // pred_check
        _
      $region10: #{rel_position_mha.1} parent=5 // pred_check_branch
        %192 = sbr.rel (%p189) target = $region12
      $region11: #{rel_position_mha.1} parent=5 // pred_region
        %s193 = ssub.s32 %s22, 1
        // Predicated region
        $region13: #{rel_position_mha.1} parent=11 // pred_check
          %p194 = pneg %p69
        $region14: #{rel_position_mha.1} parent=11 // pred_check_branch
          %196 = sbr.rel (%p194) target = $region16
        $region15: #{rel_position_mha.1} parent=11 // pred_region
          _
        $region16: #{rel_position_mha.1} parent=11 // pred_fallthru
          _
        // Predicated region
        $region17: #{rel_position_mha.1} parent=11 // pred_check
          %p197 = pneg %p90
        $region18: #{rel_position_mha.1} parent=11 // pred_check_branch
          %199 = sbr.rel (%p197) target = $region20
        $region19: #{rel_position_mha.1} parent=11 // pred_region
          _
        $region20: #{rel_position_mha.1} parent=11 // pred_fallthru
          _
        // Predicated region
        $region21: #{rel_position_mha.1} parent=11 // pred_check
          %p200 = pneg %p111
        $region22: #{rel_position_mha.1} parent=11 // pred_check_branch
          %202 = sbr.rel (%p200) target = $region24
        $region23: #{rel_position_mha.1} parent=11 // pred_region
          _
        $region24: #{rel_position_mha.1} parent=11 // pred_fallthru
          _
        // Predicated region
        $region25: #{rel_position_mha.1} parent=11 // pred_check
          %p203 = pneg %p132
        $region26: #{rel_position_mha.1} parent=11 // pred_check_branch
          %205 = sbr.rel (%p203) target = $region28
        $region27: #{rel_position_mha.1} parent=11 // pred_region
          _
        $region28: #{rel_position_mha.1} parent=11 // pred_fallthru
          _
        // Predicated region
        $region29: #{rel_position_mha.1} parent=11 // pred_check
          %p206 = pneg %p153
        $region30: #{rel_position_mha.1} parent=11 // pred_check_branch
          %208 = sbr.rel (%p206) target = $region32
        $region31: #{rel_position_mha.1} parent=11 // pred_region
          _
        $region32: #{rel_position_mha.1} parent=11 // pred_fallthru
          _
      $region12: #{rel_position_mha.1} parent=5 // pred_fallthru
        _
      %p209 = scmp.lt.s32.totalorder %s22, 2
      // Predicated region
      $region33: #{rel_position_mha.1} parent=5 // pred_check
        %p210 = pneg %p209
      $region34: #{rel_position_mha.1} parent=5 // pred_check_branch
        %212 = sbr.rel (%p210) target = $region36
      $region35: #{rel_position_mha.1} parent=5 // pred_region
        // Predicated region
        $region37: #{rel_position_mha.1} parent=35 // pred_check
          %p213 = pneg %p42
        $region38: #{rel_position_mha.1} parent=35 // pred_check_branch
          %215 = sbr.rel (%p213) target = $region40
        $region39: #{rel_position_mha.1} parent=35 // pred_region
          %p216 = scmp.lt.s32.totalorder %s22, 1
          %s217 = scalar_select %p216, %s22, 1
          %s218 = smul.addr %s217, 2
          %s219 = smul.addr %s218, 8
          %s220 = scalar_lea.vmem %s1, %s219
        $region40: #{rel_position_mha.1} parent=35 // pred_fallthru
          _
      $region36: #{rel_position_mha.1} parent=5 // pred_fallthru
        _
      %p221 = scmp.le.s32.totalorder 1, %s22
      %p222 = scmp.lt.s32.totalorder %s22, 3
      %p223 = pnand %p221, %p222
      %p224 = pneg %p223
      // Predicated region
      $region41: #{rel_position_mha.1} parent=5 // pred_check
        _
      $region42: #{rel_position_mha.1} parent=5 // pred_check_branch
        %226 = sbr.rel (%p223) target = $region44
      $region43: #{rel_position_mha.1} parent=5 // pred_region
        %s227 = ssub.s32 %s22, 1
        %p228 = scmp.lt.s32.totalorder %s27, 1
        %s229 = scalar_select %p228, %s27, 1
        %s230 = smul.addr %s229, 2
        %s231 = smul.addr %s230, 8
        %s232 = scalar_lea.vmem %s1, %s231
        %p233 = pneg %p48
        %p234 = pneg %p45
        %p235 = pneg %p69
        %p236 = pneg %p66
        %p237 = pneg %p90
        %p238 = pneg %p87
        %p239 = pneg %p111
        %p240 = pneg %p108
        %p241 = pneg %p132
        %p242 = pneg %p129
        %p243 = pneg %p153
        %p244 = pneg %p150
        %p245 = pneg %p179
        %p246 = pneg %p176
        %s247 = sand.u32 %s166, 1
        %s248 = scalar_lea.sflag [#allocation6], %s247
        %s249 = sand.u32 %s166, 1
        %s250 = smul.addr %s249, 16
        %s251 = scalar_lea.vmem [#allocation5], %s250
        %p252 = scmp.lt.s32.totalorder %s27, 1
        %s253 = scalar_select %p252, %s27, 1
        %s254 = smul.addr %s253, 2
        %s255 = smul.addr %s254, 8
        %s256 = scalar_lea.vmem %s1, %s255
        %v258 = vld [vmem:[%s256] sm:$0xff]
        %v259 = vld [vmem:[%s256 + $0x8] sm:$0xff]
        %v260 = vld [vmem:[%s2] sm:$0xff]
        %v261 = vld [vmem:[%s2 + $0x8] sm:$0xff]
        %v262 = vld [vmem:[%s2 + $0x10] sm:$0xff]
        %v263 = vld [vmem:[%s2 + $0x18] sm:$0xff]
        %v264 = vld [vmem:[%s2 + $0x20] sm:$0xff]
        %v265 = vld [vmem:[%s2 + $0x28] sm:$0xff]
        %v266 = vld [vmem:[%s2 + $0x30] sm:$0xff]
        %v267 = vld [vmem:[%s2 + $0x38] sm:$0xff]
        %v268 = vld [vmem:[%s2 + $0x40] sm:$0xff]
        %v269 = vld [vmem:[%s2 + $0x48] sm:$0xff]
        %v270 = vld [vmem:[%s2 + $0x50] sm:$0xff]
        %v271 = vld [vmem:[%s2 + $0x58] sm:$0xff]
        %v272 = vld [vmem:[%s2 + $0x60] sm:$0xff]
        %v273 = vld [vmem:[%s2 + $0x68] sm:$0xff]
        %v274 = vld [vmem:[%s2 + $0x70] sm:$0xff]
        %v275 = vld [vmem:[%s2 + $0x78] sm:$0xff]
        %v276 = vld [vmem:[%s2 + $0x80] sm:$0xff]
        %v277 = vld [vmem:[%s2 + $0x88] sm:$0xff]
        %v278 = vld [vmem:[%s2 + $0x90] sm:$0xff]
        %v279 = vld [vmem:[%s2 + $0x98] sm:$0xff]
        %v280 = vld [vmem:[%s2 + $0xa0] sm:$0xff]
        %v281 = vld [vmem:[%s2 + $0xa8] sm:$0xff]
        %v282 = vld [vmem:[%s2 + $0xb0] sm:$0xff]
        %v283 = vld [vmem:[%s2 + $0xb8] sm:$0xff]
        %v284 = vld [vmem:[%s2 + $0xc0] sm:$0xff]
        %v285 = vld [vmem:[%s2 + $0xc8] sm:$0xff]
        %v286 = vld [vmem:[%s2 + $0xd0] sm:$0xff]
        %v287 = vld [vmem:[%s2 + $0xd8] sm:$0xff]
        %v288 = vld [vmem:[%s2 + $0xe0] sm:$0xff]
        %v289 = vld [vmem:[%s2 + $0xe8] sm:$0xff]
        %v290 = vld [vmem:[%s2 + $0xf0] sm:$0xff]
        %v291 = vld [vmem:[%s2 + $0xf8] sm:$0xff]
        %v292 = vld [vmem:[%s2 + $0x100] sm:$0xff]
        %v293 = vld [vmem:[%s2 + $0x108] sm:$0xff]
        %v294 = vld [vmem:[%s2 + $0x110] sm:$0xff]
        %v295 = vld [vmem:[%s2 + $0x118] sm:$0xff]
        %v296 = vld [vmem:[%s2 + $0x120] sm:$0xff]
        %v297 = vld [vmem:[%s2 + $0x128] sm:$0xff]
        %v298 = vld [vmem:[%s2 + $0x130] sm:$0xff]
        %v299 = vld [vmem:[%s2 + $0x138] sm:$0xff]
        %v300 = vld [vmem:[%s2 + $0x140] sm:$0xff]
        %v301 = vld [vmem:[%s2 + $0x148] sm:$0xff]
        %v302 = vld [vmem:[%s2 + $0x150] sm:$0xff]
        %v303 = vld [vmem:[%s2 + $0x158] sm:$0xff]
        %v304 = vld [vmem:[%s2 + $0x160] sm:$0xff]
        %v305 = vld [vmem:[%s2 + $0x168] sm:$0xff]
        %v306 = vld [vmem:[%s2 + $0x170] sm:$0xff]
        %v307 = vld [vmem:[%s2 + $0x178] sm:$0xff]
        %308 = vmatprep.subr.mxu0 %v306
        %309 = vmatpush1.msra.mxu0 %v305
        %310 = vmatprep.subr.mxu0 %v303
        %311 = vmatpush1.msra.mxu0 %v302
        %312 = vmatprep.subr.mxu0 %v300
        %313 = vmatpush1.msra.mxu0 %v299
        %314 = vmatprep.subr.mxu0 %v297
        %315 = vmatpush1.msra.mxu0 %v296
        %316 = vmatprep.subr.mxu0 %v294
        %317 = vmatpush1.msra.mxu0 %v293
        %318 = vmatprep.subr.mxu0 %v291
        %319 = vmatpush1.msra.mxu0 %v290
        %320 = vmatprep.subr.mxu0 %v288
        %321 = vmatpush1.msra.mxu0 %v287
        %322 = vmatprep.subr.mxu0 %v285
        %323 = vmatpush1.msra.mxu0 %v284
        %324 = vmatprep.subr.mxu0 %v282
        %325 = vmatpush1.msra.mxu0 %v281
        %326 = vmatprep.subr.mxu0 %v279
        %327 = vmatpush1.msra.mxu0 %v278
        %328 = vmatprep.subr.mxu0 %v276
        %329 = vmatpush1.msra.mxu0 %v275
        %330 = vmatprep.subr.mxu0 %v273
        %331 = vmatpush1.msra.mxu0 %v272
        %332 = vmatprep.subr.mxu0 %v270
        %333 = vmatpush1.msra.mxu0 %v269
        %334 = vmatprep.subr.mxu0 %v267
        %335 = vmatpush1.msra.mxu0 %v266
        %336 = vmatprep.subr.mxu0 %v264
        %337 = vmatpush1.msra.mxu0 %v263
        %338 = vmatprep.subr.mxu0 %v261
        %339 = vmatpush1.msra.mxu0 %v260
        %340 = vmatprep.subr.mxu0 0.0
        %341 = vmatpush2.msra.mxu0 0.0
        %342 = vmatprep.subr.mxu0 0.0
        %343 = vmatpush2.msra.mxu0 0.0
        %344 = vmatprep.subr.mxu0 0.0
        %345 = vmatpush2.msra.mxu0 0.0
        %346 = vmatprep.subr.mxu0 0.0
        %347 = vmatpush2.msra.mxu0 0.0
        %348 = vmatprep.subr.mxu0 0.0
        %349 = vmatpush2.msra.mxu0 0.0
        %350 = vmatprep.subr.mxu0 0.0
        %351 = vmatpush2.msra.mxu0 0.0
        %352 = vmatprep.subr.mxu0 0.0
        %353 = vmatpush2.msra.mxu0 0.0
        %354 = vmatprep.subr.mxu0 0.0
        %355 = vmatpush2.msra.mxu0 0.0
        %356 = vmatprep.subr.mxu0 0.0
        %357 = vmatpush2.msra.mxu0 0.0
        %358 = vmatprep.subr.mxu0 0.0
        %359 = vmatpush2.msra.mxu0 0.0
        %360 = vmatprep.subr.mxu0 0.0
        %361 = vmatpush2.msra.mxu0 0.0
        %362 = vmatprep.subr.mxu0 0.0
        %363 = vmatpush2.msra.mxu0 0.0
        %364 = vmatprep.subr.mxu0 0.0
        %365 = vmatpush2.msra.mxu0 0.0
        %366 = vmatprep.subr.mxu0 0.0
        %367 = vmatpush2.msra.mxu0 0.0
        %368 = vmatprep.subr.mxu0 0.0
        %369 = vmatpush2.msra.mxu0 0.0
        %370 = vmatprep.subr.mxu0 0.0
        %371 = vmatpush2.msra.mxu0 0.0
        %372 = vmatprep.mubr.f32.mxu0 0.0
        %373 = vmatmul.mubr.f32.gmra.mxu0 %v258
        %v374 = vpop.f32.mrf.mxu0
        %v375 = vadd.f32 0.0, %v374
        %v376 = vpop.f32.mrf.mxu0
        %v377 = vadd.f32 0.0, %v376
        %378 = vmatprep.mubr.f32.mxu0 0.0
        %379 = vmatmul.mubr.f32.gmra.mxu0 %v259
        %v380 = vpop.f32.mrf.mxu0
        %v381 = vadd.f32 0.0, %v380
        %v382 = vpop.f32.mrf.mxu0
        %v383 = vadd.f32 0.0, %v382
        %384 = vdwg.mxu0
        %385 = vmatprep.subr.mxu0 0.0
        %386 = vmatpush1.msra.mxu0 %v307
        %387 = vmatprep.subr.mxu0 0.0
        %388 = vmatpush1.msra.mxu0 %v304
        %389 = vmatprep.subr.mxu0 0.0
        %390 = vmatpush1.msra.mxu0 %v301
        %391 = vmatprep.subr.mxu0 0.0
        %392 = vmatpush1.msra.mxu0 %v298
        %393 = vmatprep.subr.mxu0 0.0
        %394 = vmatpush1.msra.mxu0 %v295
        %395 = vmatprep.subr.mxu0 0.0
        %396 = vmatpush1.msra.mxu0 %v292
        %397 = vmatprep.subr.mxu0 0.0
        %398 = vmatpush1.msra.mxu0 %v289
        %399 = vmatprep.subr.mxu0 0.0
        %400 = vmatpush1.msra.mxu0 %v286
        %401 = vmatprep.subr.mxu0 0.0
        %402 = vmatpush1.msra.mxu0 %v283
        %403 = vmatprep.subr.mxu0 0.0
        %404 = vmatpush1.msra.mxu0 %v280
        %405 = vmatprep.subr.mxu0 0.0
        %406 = vmatpush1.msra.mxu0 %v277
        %407 = vmatprep.subr.mxu0 0.0
        %408 = vmatpush1.msra.mxu0 %v274
        %409 = vmatprep.subr.mxu0 0.0
        %410 = vmatpush1.msra.mxu0 %v271
        %411 = vmatprep.subr.mxu0 0.0
        %412 = vmatpush1.msra.mxu0 %v268
        %413 = vmatprep.subr.mxu0 0.0
        %414 = vmatpush1.msra.mxu0 %v265
        %415 = vmatprep.subr.mxu0 0.0
        %416 = vmatpush1.msra.mxu0 %v262
        %417 = vmatprep.subr.mxu0 0.0
        %418 = vmatpush2.msra.mxu0 0.0
        %419 = vmatprep.subr.mxu0 0.0
        %420 = vmatpush2.msra.mxu0 0.0
        %421 = vmatprep.subr.mxu0 0.0
        %422 = vmatpush2.msra.mxu0 0.0
        %423 = vmatprep.subr.mxu0 0.0
        %424 = vmatpush2.msra.mxu0 0.0
        %425 = vmatprep.subr.mxu0 0.0
        %426 = vmatpush2.msra.mxu0 0.0
        %427 = vmatprep.subr.mxu0 0.0
        %428 = vmatpush2.msra.mxu0 0.0
        %429 = vmatprep.subr.mxu0 0.0
        %430 = vmatpush2.msra.mxu0 0.0
        %431 = vmatprep.subr.mxu0 0.0
        %432 = vmatpush2.msra.mxu0 0.0
        %433 = vmatprep.subr.mxu0 0.0
        %434 = vmatpush2.msra.mxu0 0.0
        %435 = vmatprep.subr.mxu0 0.0
        %436 = vmatpush2.msra.mxu0 0.0
        %437 = vmatprep.subr.mxu0 0.0
        %438 = vmatpush2.msra.mxu0 0.0
        %439 = vmatprep.subr.mxu0 0.0
        %440 = vmatpush2.msra.mxu0 0.0
        %441 = vmatprep.subr.mxu0 0.0
        %442 = vmatpush2.msra.mxu0 0.0
        %443 = vmatprep.subr.mxu0 0.0
        %444 = vmatpush2.msra.mxu0 0.0
        %445 = vmatprep.subr.mxu0 0.0
        %446 = vmatpush2.msra.mxu0 0.0
        %447 = vmatprep.subr.mxu0 0.0
        %448 = vmatpush2.msra.mxu0 0.0
        %449 = vmatprep.mubr.f32.mxu0 0.0
        %450 = vmatmul.mubr.f32.gmra.mxu0 %v258
        %v451 = vpop.f32.mrf.mxu0
        %v452 = vadd.f32 0.0, %v451
        %v453 = vpop.f32.mrf.mxu0
        %454 = vmatprep.mubr.f32.mxu0 0.0
        %455 = vmatmul.mubr.f32.gmra.mxu0 %v259
        %v456 = vpop.f32.mrf.mxu0
        %v457 = vadd.f32 0.0, %v456
        %v458 = vpop.f32.mrf.mxu0
        %459 = vdwg.mxu0
        %v460 = vld [vmem:[%s5] sm:$0x1]
        %v462 = vlaneseq
        %v463 = vshrl.u32 %v462, 7
        %v464 = vsub.s32 0, %v463
        %v465 = vrot.slane %v460, %v464
        %v467 = vadd.f32 %v375, %v465
        %v468 = vadd.f32 %v381, %v465
        %v469 = vpack.c.bf16 %v468, %v467
        %v470 = vld [vmem:[%s6] sm:$0x1]
        %v472 = vlaneseq
        %v473 = vshrl.u32 %v472, 7
        %v474 = vsub.s32 0, %v473
        %v475 = vrot.slane %v470, %v474
        %v477 = vadd.f32 %v375, %v475
        %v478 = vadd.f32 %v381, %v475
        %v479 = vpack.c.bf16 %v478, %v477
        %v480 = vpack.c.bf16 %v383, %v377
        %v481 = vpack.c.bf16 %v457, %v452
        %v482 = vld [vmem:[%s3] sm:$0xf]
        %v483 = vld [vmem:[%s3 + $0x4] sm:$0xf]
        %v484 = vlaneseq
        %v485 = vand.u32 %v484, 127
        %s486 = sld [smem:[#allocation4 + %s27]]
        %v487 = vstv %s486
        %vm488 = vcmp.ge.s32.totalorder %v485, %v487
        %v489 = vsel %vm488, -1e+30, 0.0
        %vm490 = vcmask 138368
        %491 = vst.msk [vmem:[#allocation2] sm:$0xff] %vm490, 0.0
        %492 = vst.msk [vmem:[#allocation2 + $0x8] sm:$0xff] %vm490, 0.0
        %vm493 = vcmask 131200
        %494 = vst.msk [vmem:[#allocation2 + $0x10] sm:$0x1] %vm493, 0.0
        %v497 = vunpack.c.l.b16 %v482
        %v498 = vunpack.c.l.b16 %v483
        %v499 = vpack.c.b16 %v498, %v497
        %vm500 = vcmask 261120
        %v502 = vsel %vm500, %v479, 0
        %v505 = vsel %vm500, %v499, 0
        %507 = vmatprep.subr.bf16.mxu0 0
        %508 = vmatpush1.bf16.xpose.msra.mxu0 0
        %509 = vmatprep.subr.bf16.mxu0 0
        %510 = vmatpush1.bf16.xpose.msra.mxu0 0
        %511 = vmatprep.subr.bf16.mxu0 0
        %512 = vmatpush1.bf16.xpose.msra.mxu0 0
        %513 = vmatprep.subr.bf16.mxu0 0
        %514 = vmatpush1.bf16.xpose.msra.mxu0 0
        %515 = vmatprep.subr.bf16.mxu0 0
        %516 = vmatpush1.bf16.xpose.msra.mxu0 0
        %517 = vmatprep.subr.bf16.mxu0 0
        %518 = vmatpush1.bf16.xpose.msra.mxu0 0
        %519 = vmatprep.subr.bf16.mxu0 0
        %520 = vmatpush1.bf16.xpose.msra.mxu0 0
        %521 = vmatprep.subr.bf16.mxu0 0
        %522 = vmatpush1.bf16.xpose.msra.mxu0 %v505
        %523 = vmatprep.subr.bf16.mxu0 0
        %524 = vmatpush2.bf16.xpose.msra.mxu0 0
        %525 = vmatprep.subr.bf16.mxu0 0
        %526 = vmatpush2.bf16.xpose.msra.mxu0 0
        %527 = vmatprep.subr.bf16.mxu0 0
        %528 = vmatpush2.bf16.xpose.msra.mxu0 0
        %529 = vmatprep.subr.bf16.mxu0 0
        %530 = vmatpush2.bf16.xpose.msra.mxu0 0
        %531 = vmatprep.subr.bf16.mxu0 0
        %532 = vmatpush2.bf16.xpose.msra.mxu0 0
        %533 = vmatprep.subr.bf16.mxu0 0
        %534 = vmatpush2.bf16.xpose.msra.mxu0 0
        %535 = vmatprep.subr.bf16.mxu0 0
        %536 = vmatpush2.bf16.xpose.msra.mxu0 0
        %537 = vmatprep.subr.bf16.mxu0 0
        %538 = vmatpush2.bf16.xpose.msra.mxu0 0
        %539 = vmatprep.mubr.bf16.mxu0 0
        %540 = vmatmul.mubr.bf16.gmra.mxu0 %v502
        %v541 = vpop.f32.mrf.mxu0
        %v542 = vadd.f32 0.0, %v541
        %v543 = vpop.f32.mrf.mxu0
        %v544 = vpop.f32.mrf.mxu0
        %v545 = vadd.f32 0.0, %v544
        %v546 = vpop.f32.mrf.mxu0
        %547 = vdwg.mxu0
        %vm548 = vcmask 130048
        %549 = vst.msk [vmem:[#allocation2 + $0x1] sm:$0xff] %vm548, %v542
        %550 = vst.msk [vmem:[#allocation2 + $0x9] sm:$0xff] %vm548, %v545
        %553 = vrot.lane.b32.xlu0 %v542, 17
        %v554 = vpop.permute.xlu0 %553
        %555 = vrot.lane.b32.xlu0 %v545, 17
        %v556 = vpop.permute.xlu0 %555
        %vm559 = vcmask 269448
        %560 = vst.msk [vmem:[#allocation2] sm:$0xff] %vm559, %v554
        %561 = vst.msk [vmem:[#allocation2 + $0x8] sm:$0xff] %vm559, %v556
        %v562 = vld [vmem:[#allocation2 + $0x1] sm:$0xff]
        %v563 = vld [vmem:[#allocation2 + $0x9] sm:$0xff]
        %v564 = vlaneseq
        %v565 = vshrl.u32 %v564, 7
        %v566 = vadd.s32 %v565, 8
        %v567 = vsub.s32 15, %v565
        %v568 = vsub.s32 15, %v566
        %v569 = vand.u32 %v567, 1
        %v570 = vand.u32 %v568, 1
        %vm571 = vcmp.ne.s32.totalorder %v569, 0
        %vm572 = vcmp.ne.s32.totalorder %v570, 0
        %575 = vrot.lane.b32.xlu0 %v562, 1
        %v576 = vpop.permute.xlu0 %575
        %577 = vrot.lane.b32.xlu0 %v563, 1
        %v578 = vpop.permute.xlu0 %577
        %v581 = vsel %vm571, %v562, %v576
        %v582 = vsel %vm572, %v563, %v578
        %v583 = vand.u32 %v567, 2
        %v584 = vand.u32 %v568, 2
        %vm585 = vcmp.ne.s32.totalorder %v583, 0
        %vm586 = vcmp.ne.s32.totalorder %v584, 0
        %589 = vrot.lane.b32.xlu0 %v581, 2
        %v590 = vpop.permute.xlu0 %589
        %591 = vrot.lane.b32.xlu0 %v582, 2
        %v592 = vpop.permute.xlu0 %591
        %v595 = vsel %vm585, %v581, %v590
        %v596 = vsel %vm586, %v582, %v592
        %v597 = vand.u32 %v567, 4
        %v598 = vand.u32 %v568, 4
        %vm599 = vcmp.ne.s32.totalorder %v597, 0
        %vm600 = vcmp.ne.s32.totalorder %v598, 0
        %603 = vrot.lane.b32.xlu0 %v595, 4
        %v604 = vpop.permute.xlu0 %603
        %605 = vrot.lane.b32.xlu0 %v596, 4
        %v606 = vpop.permute.xlu0 %605
        %v609 = vsel %vm599, %v595, %v604
        %v610 = vsel %vm600, %v596, %v606
        %v611 = vand.u32 %v567, 8
        %v612 = vand.u32 %v568, 8
        %vm613 = vcmp.ne.s32.totalorder %v611, 0
        %vm614 = vcmp.ne.s32.totalorder %v612, 0
        %617 = vrot.lane.b32.xlu0 %v609, 8
        %v618 = vpop.permute.xlu0 %617
        %619 = vrot.lane.b32.xlu0 %v610, 8
        %v620 = vpop.permute.xlu0 %619
        %v623 = vsel %vm613, %v609, %v618
        %v624 = vsel %vm614, %v610, %v620
        %627 = vrot.lane.b32.xlu0 %v623, 113
        %v628 = vpop.permute.xlu0 %627
        %629 = vrot.lane.b32.xlu0 %v624, 113
        %v630 = vpop.permute.xlu0 %629
        %v634 = vsel %vm500, %v469, 0
        %v637 = vsel %vm500, %v480, 0
        %639 = vmatprep.subr.bf16.mxu0 0
        %640 = vmatpush1.bf16.xpose.msra.mxu0 0
        %641 = vmatprep.subr.bf16.mxu0 0
        %642 = vmatpush1.bf16.xpose.msra.mxu0 0
        %643 = vmatprep.subr.bf16.mxu0 0
        %644 = vmatpush1.bf16.xpose.msra.mxu0 0
        %645 = vmatprep.subr.bf16.mxu0 0
        %646 = vmatpush1.bf16.xpose.msra.mxu0 0
        %647 = vmatprep.subr.bf16.mxu0 0
        %648 = vmatpush1.bf16.xpose.msra.mxu0 0
        %649 = vmatprep.subr.bf16.mxu0 0
        %650 = vmatpush1.bf16.xpose.msra.mxu0 0
        %651 = vmatprep.subr.bf16.mxu0 0
        %652 = vmatpush1.bf16.xpose.msra.mxu0 0
        %653 = vmatprep.subr.bf16.mxu0 0
        %654 = vmatpush1.bf16.xpose.msra.mxu0 %v637
        %655 = vmatprep.subr.bf16.mxu0 0
        %656 = vmatpush2.bf16.xpose.msra.mxu0 0
        %657 = vmatprep.subr.bf16.mxu0 0
        %658 = vmatpush2.bf16.xpose.msra.mxu0 0
        %659 = vmatprep.subr.bf16.mxu0 0
        %660 = vmatpush2.bf16.xpose.msra.mxu0 0
        %661 = vmatprep.subr.bf16.mxu0 0
        %662 = vmatpush2.bf16.xpose.msra.mxu0 0
        %663 = vmatprep.subr.bf16.mxu0 0
        %664 = vmatpush2.bf16.xpose.msra.mxu0 0
        %665 = vmatprep.subr.bf16.mxu0 0
        %666 = vmatpush2.bf16.xpose.msra.mxu0 0
        %667 = vmatprep.subr.bf16.mxu0 0
        %668 = vmatpush2.bf16.xpose.msra.mxu0 0
        %669 = vmatprep.subr.bf16.mxu0 0
        %670 = vmatpush2.bf16.xpose.msra.mxu0 0
        %671 = vmatprep.mubr.bf16.mxu0 0
        %672 = vmatmul.mubr.bf16.gmra.mxu0 %v634
        %v673 = vpop.f32.mrf.mxu0
        %v674 = vadd.f32 %v628, %v673
        %v675 = vpop.f32.mrf.mxu0
        %v676 = vpop.f32.mrf.mxu0
        %v677 = vadd.f32 %v630, %v676
        %v678 = vpop.f32.mrf.mxu0
        %679 = vdwg.mxu0
        %v680 = vmul.f32 %v674, 0.17677669
        %v681 = vmul.f32 %v677, 0.17677669
        %v682 = vadd.f32 %v680, %v489
        %v683 = vadd.f32 %v681, %v489
        %v684 = vsel %vm548, %v682, -inf
        %685 = vmax.xlane.f32.xlu0 %v684
        %v686 = vpop.xlane.xlu0 %685
        %v687 = vsel %vm548, %v683, -inf
        %688 = vmax.xlane.f32.xlu0 %v687
        %v689 = vpop.xlane.xlu0 %688
        %v690 = vsub.f32 %v682, %v686
        %v691 = vsub.f32 %v683, %v689
        %v692 = vmul.f32 %v690, 1.442695
        %v693 = vpow.pop %v692
        %v694 = vmul.f32 %v691, 1.442695
        %v695 = vpow.pop %v694
        %v696 = vsel %vm548, %v693, 0.0
        %697 = vadd.xlane.f32.xlu0 %v696
        %v698 = vpop.xlane.xlu0 %697
        %v699 = vsel %vm548, %v695, 0.0
        %700 = vadd.xlane.f32.xlu0 %v699
        %v701 = vpop.xlane.xlu0 %700
        %v702 = vrcp.pop %v698
        %v703 = vrcp.pop %v701
        %v704 = vmul.f32 %v693, %v702
        %v705 = vmul.f32 %v695, %v703
        %v706 = vpack.c.bf16 %v705, %v704
        %v708 = vsel %vm548, %v706, 0
        %710 = vmatprep.subr.bf16.mxu0 0
        %711 = vmatpush1.bf16.msra.mxu0 0
        %712 = vmatprep.subr.bf16.mxu0 0
        %713 = vmatpush1.bf16.msra.mxu0 0
        %714 = vmatprep.subr.bf16.mxu0 0
        %715 = vmatpush1.bf16.msra.mxu0 0
        %716 = vmatprep.subr.bf16.mxu0 0
        %717 = vmatpush1.bf16.msra.mxu0 0
        %718 = vmatprep.subr.bf16.mxu0 0
        %719 = vmatpush1.bf16.msra.mxu0 0
        %720 = vmatprep.subr.bf16.mxu0 0
        %721 = vmatpush1.bf16.msra.mxu0 0
        %722 = vmatprep.subr.bf16.mxu0 0
        %723 = vmatpush1.bf16.msra.mxu0 0
        %724 = vmatprep.subr.bf16.mxu0 0
        %725 = vmatpush1.bf16.msra.mxu0 %v481
        %726 = vmatprep.subr.bf16.mxu0 0
        %727 = vmatpush2.bf16.msra.mxu0 0
        %728 = vmatprep.subr.bf16.mxu0 0
        %729 = vmatpush2.bf16.msra.mxu0 0
        %730 = vmatprep.subr.bf16.mxu0 0
        %731 = vmatpush2.bf16.msra.mxu0 0
        %732 = vmatprep.subr.bf16.mxu0 0
        %733 = vmatpush2.bf16.msra.mxu0 0
        %734 = vmatprep.subr.bf16.mxu0 0
        %735 = vmatpush2.bf16.msra.mxu0 0
        %736 = vmatprep.subr.bf16.mxu0 0
        %737 = vmatpush2.bf16.msra.mxu0 0
        %738 = vmatprep.subr.bf16.mxu0 0
        %739 = vmatpush2.bf16.msra.mxu0 0
        %740 = vmatprep.subr.bf16.mxu0 0
        %741 = vmatpush2.bf16.msra.mxu0 0
        %742 = vmatprep.mubr.bf16.mxu0 0
        %743 = vmatmul.mubr.bf16.gmra.mxu0 %v708
        %v744 = vpop.f32.mrf.mxu0
        %v745 = vadd.f32 0.0, %v744
        %v746 = vpop.f32.mrf.mxu0
        %v747 = vpop.f32.mrf.mxu0
        %v748 = vadd.f32 0.0, %v747
        %v749 = vpop.f32.mrf.mxu0
        %750 = vdwg.mxu0
        %752 = vrot.lane.b32.xlu0 %v479, 96
        %v753 = vpop.permute.xlu0 %752
        %754 = vrot.lane.b32.xlu0 %v499, 96
        %v755 = vpop.permute.xlu0 %754
        %v757 = vsel %vm500, %v753, 0
        %v760 = vsel %vm500, %v755, 0
        %762 = vmatprep.subr.bf16.mxu0 0
        %763 = vmatpush1.bf16.xpose.msra.mxu0 0
        %764 = vmatprep.subr.bf16.mxu0 0
        %765 = vmatpush1.bf16.xpose.msra.mxu0 0
        %766 = vmatprep.subr.bf16.mxu0 0
        %767 = vmatpush1.bf16.xpose.msra.mxu0 0
        %768 = vmatprep.subr.bf16.mxu0 0
        %769 = vmatpush1.bf16.xpose.msra.mxu0 0
        %770 = vmatprep.subr.bf16.mxu0 0
        %771 = vmatpush1.bf16.xpose.msra.mxu0 0
        %772 = vmatprep.subr.bf16.mxu0 0
        %773 = vmatpush1.bf16.xpose.msra.mxu0 0
        %774 = vmatprep.subr.bf16.mxu0 0
        %775 = vmatpush1.bf16.xpose.msra.mxu0 0
        %776 = vmatprep.subr.bf16.mxu0 0
        %777 = vmatpush1.bf16.xpose.msra.mxu0 %v760
        %778 = vmatprep.subr.bf16.mxu0 0
        %779 = vmatpush2.bf16.xpose.msra.mxu0 0
        %780 = vmatprep.subr.bf16.mxu0 0
        %781 = vmatpush2.bf16.xpose.msra.mxu0 0
        %782 = vmatprep.subr.bf16.mxu0 0
        %783 = vmatpush2.bf16.xpose.msra.mxu0 0
        %784 = vmatprep.subr.bf16.mxu0 0
        %785 = vmatpush2.bf16.xpose.msra.mxu0 0
        %786 = vmatprep.subr.bf16.mxu0 0
        %787 = vmatpush2.bf16.xpose.msra.mxu0 0
        %788 = vmatprep.subr.bf16.mxu0 0
        %789 = vmatpush2.bf16.xpose.msra.mxu0 0
        %790 = vmatprep.subr.bf16.mxu0 0
        %791 = vmatpush2.bf16.xpose.msra.mxu0 0
        %792 = vmatprep.subr.bf16.mxu0 0
        %793 = vmatpush2.bf16.xpose.msra.mxu0 0
        %794 = vmatprep.mubr.bf16.mxu0 0
        %795 = vmatmul.mubr.bf16.gmra.mxu0 %v757
        %v796 = vpop.f32.mrf.mxu0
        %v797 = vadd.f32 0.0, %v796
        %v798 = vpop.f32.mrf.mxu0
        %v799 = vpop.f32.mrf.mxu0
        %v800 = vadd.f32 0.0, %v799
        %v801 = vpop.f32.mrf.mxu0
        %802 = vdwg.mxu0
        %803 = vst.msk [vmem:[#allocation2 + $0x1] sm:$0xff] %vm548, %v797
        %804 = vst.msk [vmem:[#allocation2 + $0x9] sm:$0xff] %vm548, %v800
        %807 = vrot.lane.b32.xlu0 %v797, 17
        %v808 = vpop.permute.xlu0 %807
        %809 = vrot.lane.b32.xlu0 %v800, 17
        %v810 = vpop.permute.xlu0 %809
        %813 = vst.msk [vmem:[#allocation2] sm:$0xff] %vm559, %v808
        %814 = vst.msk [vmem:[#allocation2 + $0x8] sm:$0xff] %vm559, %v810
        %v815 = vld [vmem:[#allocation2 + $0x1] sm:$0xff]
        %v816 = vld [vmem:[#allocation2 + $0x9] sm:$0xff]
        %819 = vrot.lane.b32.xlu0 %v815, 1
        %v820 = vpop.permute.xlu0 %819
        %821 = vrot.lane.b32.xlu0 %v816, 1
        %v822 = vpop.permute.xlu0 %821
        %v825 = vsel %vm571, %v815, %v820
        %v826 = vsel %vm572, %v816, %v822
        %829 = vrot.lane.b32.xlu0 %v825, 2
        %v830 = vpop.permute.xlu0 %829
        %831 = vrot.lane.b32.xlu0 %v826, 2
        %v832 = vpop.permute.xlu0 %831
        %v835 = vsel %vm585, %v825, %v830
        %v836 = vsel %vm586, %v826, %v832
        %839 = vrot.lane.b32.xlu0 %v835, 4
        %v840 = vpop.permute.xlu0 %839
        %841 = vrot.lane.b32.xlu0 %v836, 4
        %v842 = vpop.permute.xlu0 %841
        %v845 = vsel %vm599, %v835, %v840
        %v846 = vsel %vm600, %v836, %v842
        %849 = vrot.lane.b32.xlu0 %v845, 8
        %v850 = vpop.permute.xlu0 %849
        %851 = vrot.lane.b32.xlu0 %v846, 8
        %v852 = vpop.permute.xlu0 %851
        %v855 = vsel %vm613, %v845, %v850
        %v856 = vsel %vm614, %v846, %v852
        %858 = vrot.lane.b32.xlu0 %v469, 96
        %v859 = vpop.permute.xlu0 %858
        %861 = vrot.lane.b32.xlu0 %v480, 96
        %v862 = vpop.permute.xlu0 %861
        %865 = vrot.lane.b32.xlu0 %v855, 113
        %v866 = vpop.permute.xlu0 %865
        %867 = vrot.lane.b32.xlu0 %v856, 113
        %v868 = vpop.permute.xlu0 %867
        %v872 = vsel %vm500, %v859, 0
        %v875 = vsel %vm500, %v862, 0
        %877 = vmatprep.subr.bf16.mxu0 0
        %878 = vmatpush1.bf16.xpose.msra.mxu0 0
        %879 = vmatprep.subr.bf16.mxu0 0
        %880 = vmatpush1.bf16.xpose.msra.mxu0 0
        %881 = vmatprep.subr.bf16.mxu0 0
        %882 = vmatpush1.bf16.xpose.msra.mxu0 0
        %883 = vmatprep.subr.bf16.mxu0 0
        %884 = vmatpush1.bf16.xpose.msra.mxu0 0
        %885 = vmatprep.subr.bf16.mxu0 0
        %886 = vmatpush1.bf16.xpose.msra.mxu0 0
        %887 = vmatprep.subr.bf16.mxu0 0
        %888 = vmatpush1.bf16.xpose.msra.mxu0 0
        %889 = vmatprep.subr.bf16.mxu0 0
        %890 = vmatpush1.bf16.xpose.msra.mxu0 0
        %891 = vmatprep.subr.bf16.mxu0 0
        %892 = vmatpush1.bf16.xpose.msra.mxu0 %v875
        %893 = vmatprep.subr.bf16.mxu0 0
        %894 = vmatpush2.bf16.xpose.msra.mxu0 0
        %895 = vmatprep.subr.bf16.mxu0 0
        %896 = vmatpush2.bf16.xpose.msra.mxu0 0
        %897 = vmatprep.subr.bf16.mxu0 0
        %898 = vmatpush2.bf16.xpose.msra.mxu0 0
        %899 = vmatprep.subr.bf16.mxu0 0
        %900 = vmatpush2.bf16.xpose.msra.mxu0 0
        %901 = vmatprep.subr.bf16.mxu0 0
        %902 = vmatpush2.bf16.xpose.msra.mxu0 0
        %903 = vmatprep.subr.bf16.mxu0 0
        %904 = vmatpush2.bf16.xpose.msra.mxu0 0
        %905 = vmatprep.subr.bf16.mxu0 0
        %906 = vmatpush2.bf16.xpose.msra.mxu0 0
        %907 = vmatprep.subr.bf16.mxu0 0
        %908 = vmatpush2.bf16.xpose.msra.mxu0 0
        %909 = vmatprep.mubr.bf16.mxu0 0
        %910 = vmatmul.mubr.bf16.gmra.mxu0 %v872
        %v911 = vpop.f32.mrf.mxu0
        %v912 = vadd.f32 %v866, %v911
        %v913 = vpop.f32.mrf.mxu0
        %v914 = vpop.f32.mrf.mxu0
        %v915 = vadd.f32 %v868, %v914
        %v916 = vpop.f32.mrf.mxu0
        %917 = vdwg.mxu0
        %v918 = vmul.f32 %v912, 0.17677669
        %v919 = vmul.f32 %v915, 0.17677669
        %v920 = vadd.f32 %v918, %v489
        %v921 = vadd.f32 %v919, %v489
        %v922 = vsel %vm548, %v920, -inf
        %923 = vmax.xlane.f32.xlu0 %v922
        %v924 = vpop.xlane.xlu0 %923
        %v925 = vsel %vm548, %v921, -inf
        %926 = vmax.xlane.f32.xlu0 %v925
        %v927 = vpop.xlane.xlu0 %926
        %v928 = vsub.f32 %v920, %v924
        %v929 = vsub.f32 %v921, %v927
        %v930 = vmul.f32 %v928, 1.442695
        %v931 = vpow.pop %v930
        %v932 = vmul.f32 %v929, 1.442695
        %v933 = vpow.pop %v932
        %v934 = vsel %vm548, %v931, 0.0
        %935 = vadd.xlane.f32.xlu0 %v934
        %v936 = vpop.xlane.xlu0 %935
        %v937 = vsel %vm548, %v933, 0.0
        %938 = vadd.xlane.f32.xlu0 %v937
        %v939 = vpop.xlane.xlu0 %938
        %v940 = vrcp.pop %v936
        %v941 = vrcp.pop %v939
        %v942 = vmul.f32 %v931, %v940
        %v943 = vmul.f32 %v933, %v941
        %v944 = vpack.c.bf16 %v943, %v942
        %946 = vrot.lane.b32.xlu0 %v481, 96
        %v947 = vpop.permute.xlu0 %946
        %v950 = vsel %vm548, %v944, 0
        %952 = vmatprep.subr.bf16.mxu0 0
        %953 = vmatpush1.bf16.msra.mxu0 0
        %954 = vmatprep.subr.bf16.mxu0 0
        %955 = vmatpush1.bf16.msra.mxu0 0
        %956 = vmatprep.subr.bf16.mxu0 0
        %957 = vmatpush1.bf16.msra.mxu0 0
        %958 = vmatprep.subr.bf16.mxu0 0
        %959 = vmatpush1.bf16.msra.mxu0 0
        %960 = vmatprep.subr.bf16.mxu0 0
        %961 = vmatpush1.bf16.msra.mxu0 0
        %962 = vmatprep.subr.bf16.mxu0 0
        %963 = vmatpush1.bf16.msra.mxu0 0
        %964 = vmatprep.subr.bf16.mxu0 0
        %965 = vmatpush1.bf16.msra.mxu0 0
        %966 = vmatprep.subr.bf16.mxu0 0
        %967 = vmatpush1.bf16.msra.mxu0 %v947
        %968 = vmatprep.subr.bf16.mxu0 0
        %969 = vmatpush2.bf16.msra.mxu0 0
        %970 = vmatprep.subr.bf16.mxu0 0
        %971 = vmatpush2.bf16.msra.mxu0 0
        %972 = vmatprep.subr.bf16.mxu0 0
        %973 = vmatpush2.bf16.msra.mxu0 0
        %974 = vmatprep.subr.bf16.mxu0 0
        %975 = vmatpush2.bf16.msra.mxu0 0
        %976 = vmatprep.subr.bf16.mxu0 0
        %977 = vmatpush2.bf16.msra.mxu0 0
        %978 = vmatprep.subr.bf16.mxu0 0
        %979 = vmatpush2.bf16.msra.mxu0 0
        %980 = vmatprep.subr.bf16.mxu0 0
        %981 = vmatpush2.bf16.msra.mxu0 0
        %982 = vmatprep.subr.bf16.mxu0 0
        %983 = vmatpush2.bf16.msra.mxu0 0
        %984 = vmatprep.mubr.bf16.mxu0 0
        %985 = vmatmul.mubr.bf16.gmra.mxu0 %v950
        %v986 = vpop.f32.mrf.mxu0
        %v987 = vadd.f32 0.0, %v986
        %v988 = vpop.f32.mrf.mxu0
        %v989 = vpop.f32.mrf.mxu0
        %v990 = vadd.f32 0.0, %v989
        %v991 = vpop.f32.mrf.mxu0
        %992 = vdwg.mxu0
        %993 = vrot.lane.b32.xlu0 %v479, 64
        %v994 = vpop.permute.xlu0 %993
        %995 = vrot.lane.b32.xlu0 %v499, 64
        %v996 = vpop.permute.xlu0 %995
        %v998 = vsel %vm500, %v994, 0
        %v1001 = vsel %vm500, %v996, 0
        %1003 = vmatprep.subr.bf16.mxu0 0
        %1004 = vmatpush1.bf16.xpose.msra.mxu0 0
        %1005 = vmatprep.subr.bf16.mxu0 0
        %1006 = vmatpush1.bf16.xpose.msra.mxu0 0
        %1007 = vmatprep.subr.bf16.mxu0 0
        %1008 = vmatpush1.bf16.xpose.msra.mxu0 0
        %1009 = vmatprep.subr.bf16.mxu0 0
        %1010 = vmatpush1.bf16.xpose.msra.mxu0 0
        %1011 = vmatprep.subr.bf16.mxu0 0
        %1012 = vmatpush1.bf16.xpose.msra.mxu0 0
        %1013 = vmatprep.subr.bf16.mxu0 0
        %1014 = vmatpush1.bf16.xpose.msra.mxu0 0
        %1015 = vmatprep.subr.bf16.mxu0 0
        %1016 = vmatpush1.bf16.xpose.msra.mxu0 0
        %1017 = vmatprep.subr.bf16.mxu0 0
        %1018 = vmatpush1.bf16.xpose.msra.mxu0 %v1001
        %1019 = vmatprep.subr.bf16.mxu0 0
        %1020 = vmatpush2.bf16.xpose.msra.mxu0 0
        %1021 = vmatprep.subr.bf16.mxu0 0
        %1022 = vmatpush2.bf16.xpose.msra.mxu0 0
        %1023 = vmatprep.subr.bf16.mxu0 0
        %1024 = vmatpush2.bf16.xpose.msra.mxu0 0
        %1025 = vmatprep.subr.bf16.mxu0 0
        %1026 = vmatpush2.bf16.xpose.msra.mxu0 0
        %1027 = vmatprep.subr.bf16.mxu0 0
        %1028 = vmatpush2.bf16.xpose.msra.mxu0 0
        %1029 = vmatprep.subr.bf16.mxu0 0
        %1030 = vmatpush2.bf16.xpose.msra.mxu0 0
        %1031 = vmatprep.subr.bf16.mxu0 0
        %1032 = vmatpush2.bf16.xpose.msra.mxu0 0
        %1033 = vmatprep.subr.bf16.mxu0 0
        %1034 = vmatpush2.bf16.xpose.msra.mxu0 0
        %1035 = vmatprep.mubr.bf16.mxu0 0
        %1036 = vmatmul.mubr.bf16.gmra.mxu0 %v998
        %v1037 = vpop.f32.mrf.mxu0
        %v1038 = vadd.f32 0.0, %v1037
        %v1039 = vpop.f32.mrf.mxu0
        %v1040 = vpop.f32.mrf.mxu0
        %v1041 = vadd.f32 0.0, %v1040
        %v1042 = vpop.f32.mrf.mxu0
        %1043 = vdwg.mxu0
        %1044 = vst.msk [vmem:[#allocation2 + $0x1] sm:$0xff] %vm548, %v1038
        %1045 = vst.msk [vmem:[#allocation2 + $0x9] sm:$0xff] %vm548, %v1041
        %1048 = vrot.lane.b32.xlu0 %v1038, 17
        %v1049 = vpop.permute.xlu0 %1048
        %1050 = vrot.lane.b32.xlu0 %v1041, 17
        %v1051 = vpop.permute.xlu0 %1050
        %1054 = vst.msk [vmem:[#allocation2] sm:$0xff] %vm559, %v1049
        %1055 = vst.msk [vmem:[#allocation2 + $0x8] sm:$0xff] %vm559, %v1051
        %v1056 = vld [vmem:[#allocation2 + $0x1] sm:$0xff]
        %v1057 = vld [vmem:[#allocation2 + $0x9] sm:$0xff]
        %1060 = vrot.lane.b32.xlu0 %v1056, 1
        %v1061 = vpop.permute.xlu0 %1060
        %1062 = vrot.lane.b32.xlu0 %v1057, 1
        %v1063 = vpop.permute.xlu0 %1062
        %v1066 = vsel %vm571, %v1056, %v1061
        %v1067 = vsel %vm572, %v1057, %v1063
        %1070 = vrot.lane.b32.xlu0 %v1066, 2
        %v1071 = vpop.permute.xlu0 %1070
        %1072 = vrot.lane.b32.xlu0 %v1067, 2
        %v1073 = vpop.permute.xlu0 %1072
        %v1076 = vsel %vm585, %v1066, %v1071
        %v1077 = vsel %vm586, %v1067, %v1073
        %1080 = vrot.lane.b32.xlu0 %v1076, 4
        %v1081 = vpop.permute.xlu0 %1080
        %1082 = vrot.lane.b32.xlu0 %v1077, 4
        %v1083 = vpop.permute.xlu0 %1082
        %v1086 = vsel %vm599, %v1076, %v1081
        %v1087 = vsel %vm600, %v1077, %v1083
        %1090 = vrot.lane.b32.xlu0 %v1086, 8
        %v1091 = vpop.permute.xlu0 %1090
        %1092 = vrot.lane.b32.xlu0 %v1087, 8
        %v1093 = vpop.permute.xlu0 %1092
        %v1096 = vsel %vm613, %v1086, %v1091
        %v1097 = vsel %vm614, %v1087, %v1093
        %1098 = vrot.lane.b32.xlu0 %v469, 64
        %v1099 = vpop.permute.xlu0 %1098
        %1100 = vrot.lane.b32.xlu0 %v480, 64
        %v1101 = vpop.permute.xlu0 %1100
        %1104 = vrot.lane.b32.xlu0 %v1096, 113
        %v1105 = vpop.permute.xlu0 %1104
        %1106 = vrot.lane.b32.xlu0 %v1097, 113
        %v1107 = vpop.permute.xlu0 %1106
        %v1111 = vsel %vm500, %v1099, 0
        %v1114 = vsel %vm500, %v1101, 0
        %1116 = vmatprep.subr.bf16.mxu0 0
        %1117 = vmatpush1.bf16.xpose.msra.mxu0 0
        %1118 = vmatprep.subr.bf16.mxu0 0
        %1119 = vmatpush1.bf16.xpose.msra.mxu0 0
        %1120 = vmatprep.subr.bf16.mxu0 0
        %1121 = vmatpush1.bf16.xpose.msra.mxu0 0
        %1122 = vmatprep.subr.bf16.mxu0 0
        %1123 = vmatpush1.bf16.xpose.msra.mxu0 0
        %1124 = vmatprep.subr.bf16.mxu0 0
        %1125 = vmatpush1.bf16.xpose.msra.mxu0 0
        %1126 = vmatprep.subr.bf16.mxu0 0
        %1127 = vmatpush1.bf16.xpose.msra.mxu0 0
        %1128 = vmatprep.subr.bf16.mxu0 0
        %1129 = vmatpush1.bf16.xpose.msra.mxu0 0
        %1130 = vmatprep.subr.bf16.mxu0 0
        %1131 = vmatpush1.bf16.xpose.msra.mxu0 %v1114
        %1132 = vmatprep.subr.bf16.mxu0 0
        %1133 = vmatpush2.bf16.xpose.msra.mxu0 0
        %1134 = vmatprep.subr.bf16.mxu0 0
        %1135 = vmatpush2.bf16.xpose.msra.mxu0 0
        %1136 = vmatprep.subr.bf16.mxu0 0
        %1137 = vmatpush2.bf16.xpose.msra.mxu0 0
        %1138 = vmatprep.subr.bf16.mxu0 0
        %1139 = vmatpush2.bf16.xpose.msra.mxu0 0
        %1140 = vmatprep.subr.bf16.mxu0 0
        %1141 = vmatpush2.bf16.xpose.msra.mxu0 0
        %1142 = vmatprep.subr.bf16.mxu0 0
        %1143 = vmatpush2.bf16.xpose.msra.mxu0 0
        %1144 = vmatprep.subr.bf16.mxu0 0
        %1145 = vmatpush2.bf16.xpose.msra.mxu0 0
        %1146 = vmatprep.subr.bf16.mxu0 0
        %1147 = vmatpush2.bf16.xpose.msra.mxu0 0
        %1148 = vmatprep.mubr.bf16.mxu0 0
        %1149 = vmatmul.mubr.bf16.gmra.mxu0 %v1111
        %v1150 = vpop.f32.mrf.mxu0
        %v1151 = vadd.f32 %v1105, %v1150
        %v1152 = vpop.f32.mrf.mxu0
        %v1153 = vpop.f32.mrf.mxu0
        %v1154 = vadd.f32 %v1107, %v1153
        %v1155 = vpop.f32.mrf.mxu0
        %1156 = vdwg.mxu0
        %v1157 = vmul.f32 %v1151, 0.17677669
        %v1158 = vmul.f32 %v1154, 0.17677669
        %v1159 = vadd.f32 %v1157, %v489
        %v1160 = vadd.f32 %v1158, %v489
        %v1161 = vsel %vm548, %v1159, -inf
        %1162 = vmax.xlane.f32.xlu0 %v1161
        %v1163 = vpop.xlane.xlu0 %1162
        %v1164 = vsel %vm548, %v1160, -inf
        %1165 = vmax.xlane.f32.xlu0 %v1164
        %v1166 = vpop.xlane.xlu0 %1165
        %v1167 = vsub.f32 %v1159, %v1163
        %v1168 = vsub.f32 %v1160, %v1166
        %v1169 = vmul.f32 %v1167, 1.442695
        %v1170 = vpow.pop %v1169
        %v1171 = vmul.f32 %v1168, 1.442695
        %v1172 = vpow.pop %v1171
        %v1173 = vsel %vm548, %v1170, 0.0
        %1174 = vadd.xlane.f32.xlu0 %v1173
        %v1175 = vpop.xlane.xlu0 %1174
        %v1176 = vsel %vm548, %v1172, 0.0
        %1177 = vadd.xlane.f32.xlu0 %v1176
        %v1178 = vpop.xlane.xlu0 %1177
        %v1179 = vrcp.pop %v1175
        %v1180 = vrcp.pop %v1178
        %v1181 = vmul.f32 %v1170, %v1179
        %v1182 = vmul.f32 %v1172, %v1180
        %v1183 = vpack.c.bf16 %v1182, %v1181
        %1184 = vrot.lane.b32.xlu0 %v481, 64
        %v1185 = vpop.permute.xlu0 %1184
        %v1188 = vsel %vm548, %v1183, 0
        %1190 = vmatprep.subr.bf16.mxu0 0
        %1191 = vmatpush1.bf16.msra.mxu0 0
        %1192 = vmatprep.subr.bf16.mxu0 0
        %1193 = vmatpush1.bf16.msra.mxu0 0
        %1194 = vmatprep.subr.bf16.mxu0 0
        %1195 = vmatpush1.bf16.msra.mxu0 0
        %1196 = vmatprep.subr.bf16.mxu0 0
        %1197 = vmatpush1.bf16.msra.mxu0 0
        %1198 = vmatprep.subr.bf16.mxu0 0
        %1199 = vmatpush1.bf16.msra.mxu0 0
        %1200 = vmatprep.subr.bf16.mxu0 0
        %1201 = vmatpush1.bf16.msra.mxu0 0
        %1202 = vmatprep.subr.bf16.mxu0 0
        %1203 = vmatpush1.bf16.msra.mxu0 0
        %1204 = vmatprep.subr.bf16.mxu0 0
        %1205 = vmatpush1.bf16.msra.mxu0 %v1185
        %1206 = vmatprep.subr.bf16.mxu0 0
        %1207 = vmatpush2.bf16.msra.mxu0 0
        %1208 = vmatprep.subr.bf16.mxu0 0
        %1209 = vmatpush2.bf16.msra.mxu0 0
        %1210 = vmatprep.subr.bf16.mxu0 0
        %1211 = vmatpush2.bf16.msra.mxu0 0
        %1212 = vmatprep.subr.bf16.mxu0 0
        %1213 = vmatpush2.bf16.msra.mxu0 0
        %1214 = vmatprep.subr.bf16.mxu0 0
        %1215 = vmatpush2.bf16.msra.mxu0 0
        %1216 = vmatprep.subr.bf16.mxu0 0
        %1217 = vmatpush2.bf16.msra.mxu0 0
        %1218 = vmatprep.subr.bf16.mxu0 0
        %1219 = vmatpush2.bf16.msra.mxu0 0
        %1220 = vmatprep.subr.bf16.mxu0 0
        %1221 = vmatpush2.bf16.msra.mxu0 0
        %1222 = vmatprep.mubr.bf16.mxu0 0
        %1223 = vmatmul.mubr.bf16.gmra.mxu0 %v1188
        %v1224 = vpop.f32.mrf.mxu0
        %v1225 = vadd.f32 0.0, %v1224
        %v1226 = vpop.f32.mrf.mxu0
        %v1227 = vpop.f32.mrf.mxu0
        %v1228 = vadd.f32 0.0, %v1227
        %v1229 = vpop.f32.mrf.mxu0
        %1230 = vdwg.mxu0
        %1231 = vrot.lane.b32.xlu0 %v479, 32
        %v1232 = vpop.permute.xlu0 %1231
        %1233 = vrot.lane.b32.xlu0 %v499, 32
        %v1234 = vpop.permute.xlu0 %1233
        %v1236 = vsel %vm500, %v1232, 0
        %v1239 = vsel %vm500, %v1234, 0
        %1241 = vmatprep.subr.bf16.mxu0 0
        %1242 = vmatpush1.bf16.xpose.msra.mxu0 0
        %1243 = vmatprep.subr.bf16.mxu0 0
        %1244 = vmatpush1.bf16.xpose.msra.mxu0 0
        %1245 = vmatprep.subr.bf16.mxu0 0
        %1246 = vmatpush1.bf16.xpose.msra.mxu0 0
        %1247 = vmatprep.subr.bf16.mxu0 0
        %1248 = vmatpush1.bf16.xpose.msra.mxu0 0
        %1249 = vmatprep.subr.bf16.mxu0 0
        %1250 = vmatpush1.bf16.xpose.msra.mxu0 0
        %1251 = vmatprep.subr.bf16.mxu0 0
        %1252 = vmatpush1.bf16.xpose.msra.mxu0 0
        %1253 = vmatprep.subr.bf16.mxu0 0
        %1254 = vmatpush1.bf16.xpose.msra.mxu0 0
        %1255 = vmatprep.subr.bf16.mxu0 0
        %1256 = vmatpush1.bf16.xpose.msra.mxu0 %v1239
        %1257 = vmatprep.subr.bf16.mxu0 0
        %1258 = vmatpush2.bf16.xpose.msra.mxu0 0
        %1259 = vmatprep.subr.bf16.mxu0 0
        %1260 = vmatpush2.bf16.xpose.msra.mxu0 0
        %1261 = vmatprep.subr.bf16.mxu0 0
        %1262 = vmatpush2.bf16.xpose.msra.mxu0 0
        %1263 = vmatprep.subr.bf16.mxu0 0
        %1264 = vmatpush2.bf16.xpose.msra.mxu0 0
        %1265 = vmatprep.subr.bf16.mxu0 0
        %1266 = vmatpush2.bf16.xpose.msra.mxu0 0
        %1267 = vmatprep.subr.bf16.mxu0 0
        %1268 = vmatpush2.bf16.xpose.msra.mxu0 0
        %1269 = vmatprep.subr.bf16.mxu0 0
        %1270 = vmatpush2.bf16.xpose.msra.mxu0 0
        %1271 = vmatprep.subr.bf16.mxu0 0
        %1272 = vmatpush2.bf16.xpose.msra.mxu0 0
        %1273 = vmatprep.mubr.bf16.mxu0 0
        %1274 = vmatmul.mubr.bf16.gmra.mxu0 %v1236
        %v1275 = vpop.f32.mrf.mxu0
        %v1276 = vadd.f32 0.0, %v1275
        %v1277 = vpop.f32.mrf.mxu0
        %v1278 = vpop.f32.mrf.mxu0
        %v1279 = vadd.f32 0.0, %v1278
        %v1280 = vpop.f32.mrf.mxu0
        %1281 = vdwg.mxu0
        %1282 = vst.msk [vmem:[#allocation2 + $0x1] sm:$0xff] %vm548, %v1276
        %1283 = vst.msk [vmem:[#allocation2 + $0x9] sm:$0xff] %vm548, %v1279
        %1286 = vrot.lane.b32.xlu0 %v1276, 17
        %v1287 = vpop.permute.xlu0 %1286
        %1288 = vrot.lane.b32.xlu0 %v1279, 17
        %v1289 = vpop.permute.xlu0 %1288
        %1292 = vst.msk [vmem:[#allocation2] sm:$0xff] %vm559, %v1287
        %1293 = vst.msk [vmem:[#allocation2 + $0x8] sm:$0xff] %vm559, %v1289
        %v1294 = vld [vmem:[#allocation2 + $0x1] sm:$0xff]
        %v1295 = vld [vmem:[#allocation2 + $0x9] sm:$0xff]
        %1298 = vrot.lane.b32.xlu0 %v1294, 1
        %v1299 = vpop.permute.xlu0 %1298
        %1300 = vrot.lane.b32.xlu0 %v1295, 1
        %v1301 = vpop.permute.xlu0 %1300
        %v1304 = vsel %vm571, %v1294, %v1299
        %v1305 = vsel %vm572, %v1295, %v1301
        %1308 = vrot.lane.b32.xlu0 %v1304, 2
        %v1309 = vpop.permute.xlu0 %1308
        %1310 = vrot.lane.b32.xlu0 %v1305, 2
        %v1311 = vpop.permute.xlu0 %1310
        %v1314 = vsel %vm585, %v1304, %v1309
        %v1315 = vsel %vm586, %v1305, %v1311
        %1318 = vrot.lane.b32.xlu0 %v1314, 4
        %v1319 = vpop.permute.xlu0 %1318
        %1320 = vrot.lane.b32.xlu0 %v1315, 4
        %v1321 = vpop.permute.xlu0 %1320
        %v1324 = vsel %vm599, %v1314, %v1319
        %v1325 = vsel %vm600, %v1315, %v1321
        %1328 = vrot.lane.b32.xlu0 %v1324, 8
        %v1329 = vpop.permute.xlu0 %1328
        %1330 = vrot.lane.b32.xlu0 %v1325, 8
        %v1331 = vpop.permute.xlu0 %1330
        %v1334 = vsel %vm613, %v1324, %v1329
        %v1335 = vsel %vm614, %v1325, %v1331
        %1336 = vrot.lane.b32.xlu0 %v469, 32
        %v1337 = vpop.permute.xlu0 %1336
        %1338 = vrot.lane.b32.xlu0 %v480, 32
        %v1339 = vpop.permute.xlu0 %1338
        %1342 = vrot.lane.b32.xlu0 %v1334, 113
        %v1343 = vpop.permute.xlu0 %1342
        %1344 = vrot.lane.b32.xlu0 %v1335, 113
        %v1345 = vpop.permute.xlu0 %1344
        %v1349 = vsel %vm500, %v1337, 0
        %v1352 = vsel %vm500, %v1339, 0
        %1354 = vmatprep.subr.bf16.mxu0 0
        %1355 = vmatpush1.bf16.xpose.msra.mxu0 0
        %1356 = vmatprep.subr.bf16.mxu0 0
        %1357 = vmatpush1.bf16.xpose.msra.mxu0 0
        %1358 = vmatprep.subr.bf16.mxu0 0
        %1359 = vmatpush1.bf16.xpose.msra.mxu0 0
        %1360 = vmatprep.subr.bf16.mxu0 0
        %1361 = vmatpush1.bf16.xpose.msra.mxu0 0
        %1362 = vmatprep.subr.bf16.mxu0 0
        %1363 = vmatpush1.bf16.xpose.msra.mxu0 0
        %1364 = vmatprep.subr.bf16.mxu0 0
        %1365 = vmatpush1.bf16.xpose.msra.mxu0 0
        %1366 = vmatprep.subr.bf16.mxu0 0
        %1367 = vmatpush1.bf16.xpose.msra.mxu0 0
        %1368 = vmatprep.subr.bf16.mxu0 0
        %1369 = vmatpush1.bf16.xpose.msra.mxu0 %v1352
        %1370 = vmatprep.subr.bf16.mxu0 0
        %1371 = vmatpush2.bf16.xpose.msra.mxu0 0
        %1372 = vmatprep.subr.bf16.mxu0 0
        %1373 = vmatpush2.bf16.xpose.msra.mxu0 0
        %1374 = vmatprep.subr.bf16.mxu0 0
        %1375 = vmatpush2.bf16.xpose.msra.mxu0 0
        %1376 = vmatprep.subr.bf16.mxu0 0
        %1377 = vmatpush2.bf16.xpose.msra.mxu0 0
        %1378 = vmatprep.subr.bf16.mxu0 0
        %1379 = vmatpush2.bf16.xpose.msra.mxu0 0
        %1380 = vmatprep.subr.bf16.mxu0 0
        %1381 = vmatpush2.bf16.xpose.msra.mxu0 0
        %1382 = vmatprep.subr.bf16.mxu0 0
        %1383 = vmatpush2.bf16.xpose.msra.mxu0 0
        %1384 = vmatprep.subr.bf16.mxu0 0
        %1385 = vmatpush2.bf16.xpose.msra.mxu0 0
        %1386 = vmatprep.mubr.bf16.mxu0 0
        %1387 = vmatmul.mubr.bf16.gmra.mxu0 %v1349
        %v1388 = vpop.f32.mrf.mxu0
        %v1389 = vadd.f32 %v1343, %v1388
        %v1390 = vpop.f32.mrf.mxu0
        %v1391 = vpop.f32.mrf.mxu0
        %v1392 = vadd.f32 %v1345, %v1391
        %v1393 = vpop.f32.mrf.mxu0
        %1394 = vdwg.mxu0
        %v1395 = vmul.f32 %v1389, 0.17677669
        %v1396 = vmul.f32 %v1392, 0.17677669
        %v1397 = vadd.f32 %v1395, %v489
        %v1398 = vadd.f32 %v1396, %v489
        %v1399 = vsel %vm548, %v1397, -inf
        %1400 = vmax.xlane.f32.xlu0 %v1399
        %v1401 = vpop.xlane.xlu0 %1400
        %v1402 = vsel %vm548, %v1398, -inf
        %1403 = vmax.xlane.f32.xlu0 %v1402
        %v1404 = vpop.xlane.xlu0 %1403
        %v1405 = vsub.f32 %v1397, %v1401
        %v1406 = vsub.f32 %v1398, %v1404
        %v1407 = vmul.f32 %v1405, 1.442695
        %v1408 = vpow.pop %v1407
        %v1409 = vmul.f32 %v1406, 1.442695
        %v1410 = vpow.pop %v1409
        %v1411 = vsel %vm548, %v1408, 0.0
        %1412 = vadd.xlane.f32.xlu0 %v1411
        %v1413 = vpop.xlane.xlu0 %1412
        %v1414 = vsel %vm548, %v1410, 0.0
        %1415 = vadd.xlane.f32.xlu0 %v1414
        %v1416 = vpop.xlane.xlu0 %1415
        %v1417 = vrcp.pop %v1413
        %v1418 = vrcp.pop %v1416
        %v1419 = vmul.f32 %v1408, %v1417
        %v1420 = vmul.f32 %v1410, %v1418
        %v1421 = vpack.c.bf16 %v1420, %v1419
        %1422 = vrot.lane.b32.xlu0 %v481, 32
        %v1423 = vpop.permute.xlu0 %1422
        %v1426 = vsel %vm548, %v1421, 0
        %1428 = vmatprep.subr.bf16.mxu0 0
        %1429 = vmatpush1.bf16.msra.mxu0 0
        %1430 = vmatprep.subr.bf16.mxu0 0
        %1431 = vmatpush1.bf16.msra.mxu0 0
        %1432 = vmatprep.subr.bf16.mxu0 0
        %1433 = vmatpush1.bf16.msra.mxu0 0
        %1434 = vmatprep.subr.bf16.mxu0 0
        %1435 = vmatpush1.bf16.msra.mxu0 0
        %1436 = vmatprep.subr.bf16.mxu0 0
        %1437 = vmatpush1.bf16.msra.mxu0 0
        %1438 = vmatprep.subr.bf16.mxu0 0
        %1439 = vmatpush1.bf16.msra.mxu0 0
        %1440 = vmatprep.subr.bf16.mxu0 0
        %1441 = vmatpush1.bf16.msra.mxu0 0
        %1442 = vmatprep.subr.bf16.mxu0 0
        %1443 = vmatpush1.bf16.msra.mxu0 %v1423
        %1444 = vmatprep.subr.bf16.mxu0 0
        %1445 = vmatpush2.bf16.msra.mxu0 0
        %1446 = vmatprep.subr.bf16.mxu0 0
        %1447 = vmatpush2.bf16.msra.mxu0 0
        %1448 = vmatprep.subr.bf16.mxu0 0
        %1449 = vmatpush2.bf16.msra.mxu0 0
        %1450 = vmatprep.subr.bf16.mxu0 0
        %1451 = vmatpush2.bf16.msra.mxu0 0
        %1452 = vmatprep.subr.bf16.mxu0 0
        %1453 = vmatpush2.bf16.msra.mxu0 0
        %1454 = vmatprep.subr.bf16.mxu0 0
        %1455 = vmatpush2.bf16.msra.mxu0 0
        %1456 = vmatprep.subr.bf16.mxu0 0
        %1457 = vmatpush2.bf16.msra.mxu0 0
        %1458 = vmatprep.subr.bf16.mxu0 0
        %1459 = vmatpush2.bf16.msra.mxu0 0
        %1460 = vmatprep.mubr.bf16.mxu0 0
        %1461 = vmatmul.mubr.bf16.gmra.mxu0 %v1426
        %v1462 = vpop.f32.mrf.mxu0
        %v1463 = vadd.f32 0.0, %v1462
        %v1464 = vpop.f32.mrf.mxu0
        %v1465 = vpop.f32.mrf.mxu0
        %v1466 = vadd.f32 0.0, %v1465
        %v1467 = vpop.f32.mrf.mxu0
        %1468 = vdwg.mxu0
        %1471 = vrot.lane.b32.xlu0 %v987, 32
        %v1472 = vpop.permute.xlu0 %1471
        %1473 = vrot.lane.b32.xlu0 %v990, 32
        %v1474 = vpop.permute.xlu0 %1473
        %1479 = vrot.lane.b32.xlu0 %v1225, 64
        %v1480 = vpop.permute.xlu0 %1479
        %1481 = vrot.lane.b32.xlu0 %v1228, 64
        %v1482 = vpop.permute.xlu0 %1481
        %1487 = vrot.lane.b32.xlu0 %v1463, 96
        %v1488 = vpop.permute.xlu0 %1487
        %1489 = vrot.lane.b32.xlu0 %v1466, 96
        %v1490 = vpop.permute.xlu0 %1489
        %v1493 = vsel %vm500, %v745, %v1472
        %v1494 = vsel %vm500, %v748, %v1474
        %vm1495 = vcmask 523264
        %v1496 = vsel %vm1495, %v1493, %v1480
        %v1497 = vsel %vm1495, %v1494, %v1482
        %vm1498 = vcmask 785408
        %v1499 = vsel %vm1498, %v1496, %v1488
        %v1500 = vsel %vm1498, %v1497, %v1490
        %v1501 = vld [vmem:[%s4] sm:$0xff]
        %v1502 = vld [vmem:[%s4 + $0x8] sm:$0xff]
        %v1503 = vld [vmem:[%s4 + $0x10] sm:$0xff]
        %v1504 = vld [vmem:[%s4 + $0x18] sm:$0xff]
        %v1505 = vld [vmem:[%s4 + $0x20] sm:$0xff]
        %v1506 = vld [vmem:[%s4 + $0x28] sm:$0xff]
        %v1507 = vld [vmem:[%s4 + $0x30] sm:$0xff]
        %v1508 = vld [vmem:[%s4 + $0x38] sm:$0xff]
        %v1509 = vld [vmem:[%s4 + $0x40] sm:$0xff]
        %v1510 = vld [vmem:[%s4 + $0x48] sm:$0xff]
        %v1511 = vld [vmem:[%s4 + $0x50] sm:$0xff]
        %v1512 = vld [vmem:[%s4 + $0x58] sm:$0xff]
        %v1513 = vld [vmem:[%s4 + $0x60] sm:$0xff]
        %v1514 = vld [vmem:[%s4 + $0x68] sm:$0xff]
        %v1515 = vld [vmem:[%s4 + $0x70] sm:$0xff]
        %v1516 = vld [vmem:[%s4 + $0x78] sm:$0xff]
        %1517 = vmatprep.subr.mxu0 0.0
        %1518 = vmatpush1.msra.mxu0 %v1516
        %1519 = vmatprep.subr.mxu0 0.0
        %1520 = vmatpush1.msra.mxu0 %v1515
        %1521 = vmatprep.subr.mxu0 0.0
        %1522 = vmatpush1.msra.mxu0 %v1514
        %1523 = vmatprep.subr.mxu0 0.0
        %1524 = vmatpush1.msra.mxu0 %v1513
        %1525 = vmatprep.subr.mxu0 0.0
        %1526 = vmatpush1.msra.mxu0 %v1512
        %1527 = vmatprep.subr.mxu0 0.0
        %1528 = vmatpush1.msra.mxu0 %v1511
        %1529 = vmatprep.subr.mxu0 0.0
        %1530 = vmatpush1.msra.mxu0 %v1510
        %1531 = vmatprep.subr.mxu0 0.0
        %1532 = vmatpush1.msra.mxu0 %v1509
        %1533 = vmatprep.subr.mxu0 0.0
        %1534 = vmatpush1.msra.mxu0 %v1508
        %1535 = vmatprep.subr.mxu0 0.0
        %1536 = vmatpush1.msra.mxu0 %v1507
        %1537 = vmatprep.subr.mxu0 0.0
        %1538 = vmatpush1.msra.mxu0 %v1506
        %1539 = vmatprep.subr.mxu0 0.0
        %1540 = vmatpush1.msra.mxu0 %v1505
        %1541 = vmatprep.subr.mxu0 0.0
        %1542 = vmatpush1.msra.mxu0 %v1504
        %1543 = vmatprep.subr.mxu0 0.0
        %1544 = vmatpush1.msra.mxu0 %v1503
        %1545 = vmatprep.subr.mxu0 0.0
        %1546 = vmatpush1.msra.mxu0 %v1502
        %1547 = vmatprep.subr.mxu0 0.0
        %1548 = vmatpush1.msra.mxu0 %v1501
        %1549 = vmatprep.subr.mxu0 0.0
        %1550 = vmatpush2.msra.mxu0 0.0
        %1551 = vmatprep.subr.mxu0 0.0
        %1552 = vmatpush2.msra.mxu0 0.0
        %1553 = vmatprep.subr.mxu0 0.0
        %1554 = vmatpush2.msra.mxu0 0.0
        %1555 = vmatprep.subr.mxu0 0.0
        %1556 = vmatpush2.msra.mxu0 0.0
        %1557 = vmatprep.subr.mxu0 0.0
        %1558 = vmatpush2.msra.mxu0 0.0
        %1559 = vmatprep.subr.mxu0 0.0
        %1560 = vmatpush2.msra.mxu0 0.0
        %1561 = vmatprep.subr.mxu0 0.0
        %1562 = vmatpush2.msra.mxu0 0.0
        %1563 = vmatprep.subr.mxu0 0.0
        %1564 = vmatpush2.msra.mxu0 0.0
        %1565 = vmatprep.subr.mxu0 0.0
        %1566 = vmatpush2.msra.mxu0 0.0
        %1567 = vmatprep.subr.mxu0 0.0
        %1568 = vmatpush2.msra.mxu0 0.0
        %1569 = vmatprep.subr.mxu0 0.0
        %1570 = vmatpush2.msra.mxu0 0.0
        %1571 = vmatprep.subr.mxu0 0.0
        %1572 = vmatpush2.msra.mxu0 0.0
        %1573 = vmatprep.subr.mxu0 0.0
        %1574 = vmatpush2.msra.mxu0 0.0
        %1575 = vmatprep.subr.mxu0 0.0
        %1576 = vmatpush2.msra.mxu0 0.0
        %1577 = vmatprep.subr.mxu0 0.0
        %1578 = vmatpush2.msra.mxu0 0.0
        %1579 = vmatprep.subr.mxu0 0.0
        %1580 = vmatpush2.msra.mxu0 0.0
        %1581 = vmatprep.mubr.f32.mxu0 0.0
        %1582 = vmatmul.mubr.f32.gmra.mxu0 %v1499
        %v1583 = vpop.f32.mrf.mxu0
        %v1584 = vadd.f32 0.0, %v1583
        %v1585 = vpop.f32.mrf.mxu0
        %1586 = vmatprep.mubr.f32.mxu0 0.0
        %1587 = vmatmul.mubr.f32.gmra.mxu0 %v1500
        %v1588 = vpop.f32.mrf.mxu0
        %v1589 = vadd.f32 0.0, %v1588
        %v1590 = vpop.f32.mrf.mxu0
        %1591 = vdwg.mxu0
        %1592 = vst [vmem:[%s251] sm:$0xff] %v1584
        %1593 = vst [vmem:[%s251 + $0x8] sm:$0xff] %v1589
        %s1594 = sand.u32 %s166, 1
        %s1595 = scalar_lea.sflag [#allocation6], %s1594
        %s1596 = sand.u32 %s166, 1
        %s1597 = smul.addr %s1596, 16
        %s1598 = scalar_lea.vmem [#allocation5], %s1597
        // Predicated region
        $region45: #{rel_position_mha.1} parent=43 // pred_check
          %p1599 = pneg %p176
        $region46: #{rel_position_mha.1} parent=43 // pred_check_branch
          %1601 = sbr.rel (%p1599) target = $region48
        $region47: #{rel_position_mha.1} parent=43 // pred_region
          %s1603 = ssub.s32 256, 256
          %1604 = vsyncadd %s1595, %s1603
          %s1605 = smul.addr %s27, 2
          %s1606 = smul.addr %s1605, 128
          %s1607 = scalar_lea.hbm %s7, %s1606
          %s1608 = sshll.u32 %s1598, 4
          %s1609 = int_to_ptr.vmem [resolvable:$true] %s1608
          %1614 = dma.vmem_to_hbm [thread:$0]  %s1609, 256, %s1607, %s1595, 128, 128, 8
        $region48: #{rel_position_mha.1} parent=43 // pred_fallthru
          _
      $region44: #{rel_position_mha.1} parent=5 // pred_fallthru
        _
      %p1615 = scmp.le.s32.totalorder 2, %s22
      // Predicated region
      $region49: #{rel_position_mha.1} parent=5 // pred_check
        %p1616 = pneg %p1615
      $region50: #{rel_position_mha.1} parent=5 // pred_check_branch
        %1618 = sbr.rel (%p1616) target = $region52
      $region51: #{rel_position_mha.1} parent=5 // pred_region
        %s1619 = ssub.s32 %s22, 2
        // Predicated region
        $region53: #{rel_position_mha.1} parent=51 // pred_check
          %p1620 = pneg %p182
        $region54: #{rel_position_mha.1} parent=51 // pred_check_branch
          %1622 = sbr.rel (%p1620) target = $region56
        $region55: #{rel_position_mha.1} parent=51 // pred_region
          %s1623 = sand.u32 %s167, 1
          %s1624 = scalar_lea.sflag [#allocation6], %s1623
          %s1625 = sand.u32 %s167, 1
          %s1626 = smul.addr %s1625, 16
          %s1627 = scalar_lea.vmem [#allocation5], %s1626
          %1628 = dma.done %s1624, 256
        $region56: #{rel_position_mha.1} parent=51 // pred_fallthru
          _
      $region52: #{rel_position_mha.1} parent=5 // pred_fallthru
        _
    $region6: #{rel_position_mha.1} parent=1 // loop_footer
      %s26 = sadd.s32 1, %s22
    $region7: #{rel_position_mha.1} parent=1 // loop_footer_branch
      %21 = sbr.rel target = $region3
    $region8: #{rel_position_mha.1} parent=1 // loop_exit
      _
    %1629 = vsyncpa [#allocation6], 1
    %s1630 = scalar_lea.sflag [#allocation6], 1
    %1631 = vsyncpa %s1630, 1

</llo_original>
